<compile_context>
chip_gen: v7x
topology: tpu7x:2x2x1
jax: 0.10.0
libtpu: 0.0.40
codegen_flags: <defaults>
</compile_context>

<pallas_src>
import jax
import jax.numpy as jnp
from jax.experimental import pallas as pl
from jax.experimental.pallas import tpu as pltpu

_LANE = 128
_ROW_ALIGN = 16  # bf16 packs 2 rows/sublane -> full vregs, unmasked stores


def _cdiv(a, b):
    return -(-a // b)


def _round_up(x, m):
    return _cdiv(x, m) * m


def _vmem_limit_bytes():
    """Generation-aware VMEM limit: 3/4 of physical (96 MiB v5e/v6e, 48 MiB v7x)."""
    try:
        cap = int(pltpu.get_tpu_info().vmem_capacity_bytes)
    except Exception:  # conservative fallback, valid on every generation
        cap = 64 * 1024 * 1024
    return (cap // 4) * 3


def _make_kernel(n_branches):
    """Kernel: n inputs + 4 weight refs + n outputs + n f32 accumulators."""

    def kernel(*refs):
        x_refs = refs[:n_branches]
        w1_ref, b1_ref, w2_ref, b2_ref = refs[n_branches:n_branches + 4]
        o_refs = refs[n_branches + 4:n_branches + 4 + n_branches]
        acc_refs = refs[n_branches + 4 + n_branches:]

        k = pl.program_id(1)

        @pl.when(k == 0)
        def _init():
            for acc in acc_refs:
                acc[...] = jnp.zeros_like(acc)

        # Layer-1 partial: cast to bf16 on the VPU at the dot site; weights are
        # read per-use (not hoisted) so live ranges stay bounded per branch.
        for x_ref, acc in zip(x_refs, acc_refs):
            acc[...] += jnp.dot(
                x_ref[...].astype(jnp.bfloat16),
                w1_ref[...],
                preferred_element_type=jnp.float32,
            )

        @pl.when(k == pl.num_programs(1) - 1)
        def _finalize():
            for acc, o_ref in zip(acc_refs, o_refs):
                h = jnp.maximum(acc[...] + b1_ref[...], 0.0)
                o = jnp.dot(
                    h.astype(jnp.bfloat16),
                    w2_ref[...],
                    preferred_element_type=jnp.float32,
                )
                o_ref[...] = (o + b2_ref[...]).astype(o_ref.dtype)

    return kernel


def prepare_params(params):
    """Zero-pad hidden/embed dims to 128 lanes; weights -> bf16, biases f32."""
    w1, b1, w2, b2 = params
    D, H = w1.shape
    E = w2.shape[1]
    Hp = _round_up(H, _LANE)
    Ep = _round_up(E, _LANE)
    w1p = jnp.zeros((D, Hp), jnp.bfloat16).at[:, :H].set(w1.astype(jnp.bfloat16))
    b1p = jnp.zeros((1, Hp), jnp.float32).at[:, :H].set(b1.reshape(1, -1))
    w2p = jnp.zeros((Hp, Ep), jnp.bfloat16).at[:H, :E].set(w2.astype(jnp.bfloat16))
    b2p = jnp.zeros((1, Ep), jnp.float32).at[:, :E].set(b2.reshape(1, -1))
    return (w1p, b1p, w2p, b2p), E


def _embed_multi(xs, padded_params, embed_dim, tm=512):
    """Shared embedding net over len(xs) branches in one fused pallas_call."""
    w1p, b1p, w2p, b2p = padded_params
    D, Hp = w1p.shape
    Ep = w2p.shape[1]
    n = len(xs)
    B = xs[0].shape[0]
    x_bytes = jnp.dtype(xs[0].dtype).itemsize

    # ---- Row tiling: >=2 tiles (>=4 for larger B) so v7x's second TC is not
    # idle and DMA/compute pipelining exists; TM rounded to 16 (bf16 packing)
    # and sized to minimize last-tile padding.
    if B >= 4 * _ROW_ALIGN:
        min_tiles = 4
    elif B >= 2 * _ROW_ALIGN:
        min_tiles = 2
    else:
        min_tiles = 1
    n_row_tiles = max(_cdiv(B, tm), min_tiles)
    TM = _round_up(_cdiv(B, n_row_tiles), _ROW_ALIGN)
    n_row_tiles = _cdiv(B, TM)
    Mp = n_row_tiles * TM

    # ---- K tiling over the flattened input dim so large images fit VMEM.
    vmem_limit = _vmem_limit_bytes()
    fixed = (n * TM * Hp * 4                        # f32 accumulators (scratch)
             + 2 * (Hp * Ep * 2 + (Hp + Ep) * 4)    # w2 + biases (double-buffered)
             + 2 * n * TM * Ep * 4)                 # f32 outputs (double-buffered)
    per_tk = 2 * (n * TM * x_bytes + Hp * 2)        # inputs + w1 slice per unit K
    budget = max(int((vmem_limit - fixed) * 0.8), per_tk * _LANE)
    max_tk = max(_LANE, (budget // per_tk) // _LANE * _LANE)

    if D <= max_tk:
        TK, Dp = D, D                  # single K step; w1 stays VMEM-resident
    elif D % _LANE == 0:
        TK = _LANE                     # largest 128-multiple tile dividing D
        t = max_tk
        while t >= _LANE:
            if D % t == 0:
                TK = t
                break
            t -= _LANE
        Dp = D
    else:
        TK = max_tk                    # rare path: pad D up to a TK multiple
        Dp = _round_up(D, TK)
    n_k_tiles = Dp // TK

    def prep(x):
        xf = x.reshape(B, -1)          # contiguous view; bf16 cast is in-kernel
        pad_rows, pad_cols = Mp - B, Dp - D
        if pad_rows or pad_cols:
            xf = jnp.pad(xf, ((0, pad_rows), (0, pad_cols)))
        return xf

    xs_flat = [prep(x) for x in xs]
    if Dp != D:
        w1p = jnp.pad(w1p, ((0, Dp - D), (0, 0)))  # zero rows: no effect on dot

    x_spec = pl.BlockSpec((TM, TK), lambda i, k: (i, k))
    w1_spec = pl.BlockSpec((TK, Hp), lambda i, k: (k, 0))
    pin = lambda shape: pl.BlockSpec(shape, lambda i, k: (0, 0))
    out_spec = pl.BlockSpec((TM, Ep), lambda i, k: (i, 0))

    flops = n * 2 * Mp * (Dp * Hp + Hp * Ep)
    bytes_accessed = (n * Mp * Dp * x_bytes            # activations in (native dtype)
                      + n_row_tiles * Dp * Hp * 2      # w1 streamed per row tile
                      + Hp * Ep * 2 + (Hp + Ep) * 4    # w2 + biases
                      + n * Mp * Ep * 4)               # f32 embeddings out

    outs = pl.pallas_call(
        _make_kernel(n),
        out_shape=tuple(
            jax.ShapeDtypeStruct((Mp, Ep), jnp.float32) for _ in range(n)
        ),
        grid=(n_row_tiles, n_k_tiles),
        in_specs=[x_spec] * n + [w1_spec, pin((1, Hp)), pin((Hp, Ep)), pin((1, Ep))],
        out_specs=tuple(out_spec for _ in range(n)),
        scratch_shapes=[pltpu.VMEM((TM, Hp), jnp.float32) for _ in range(n)],
        compiler_params=pltpu.CompilerParams(
            dimension_semantics=("parallel", "arbitrary"),
            vmem_limit_bytes=vmem_limit,
        ),
        cost_estimate=pl.CostEstimate(
            flops=flops, transcendentals=0, bytes_accessed=bytes_accessed
        ),
    )(*xs_flat, w1p, b1p, w2p, b2p)

    return tuple(o[:B, :embed_dim] for o in outs)


def make_triplet_net(params, tm=512):
    """Pad/cast weights once, return jitted forward / get_embedding closures."""
    padded, E = prepare_params(params)   # runs once; cached in the closures

    @jax.jit
    def _fwd(x1, x2, x3, w1p, b1p, w2p, b2p):
        return _embed_multi((x1, x2, x3), (w1p, b1p, w2p, b2p), E, tm)

    @jax.jit
    def _emb(x, w1p, b1p, w2p, b2p):
        return _embed_multi((x,), (w1p, b1p, w2p, b2p), E, tm)[0]

    def forward(x1, x2, x3):
        """Reproduces TripletNet.forward: (emb(x1), emb(x2), emb(x3))."""
        return _fwd(x1, x2, x3, *padded)

    def get_embedding(x):
        """Reproduces TripletNet.get_emdding."""
        return _emb(x, *padded)

    return forward, get_embedding


def init_params(key, in_dim, hidden, embed_dim):
    k1, k2, k3, k4 = jax.random.split(key, 4)
    # PyTorch-Linear-like uniform init: U(-1/sqrt(fan_in), 1/sqrt(fan_in)).
    lim1 = 1.0 / jnp.sqrt(jnp.float32(in_dim))
    lim2 = 1.0 / jnp.sqrt(jnp.float32(hidden))
    w1 = jax.random.uniform(k1, (in_dim, hidden), jnp.float32, -lim1, lim1)
    b1 = jax.random.uniform(k2, (1, hidden), jnp.float32, -lim1, lim1)
    w2 = jax.random.uniform(k3, (hidden, embed_dim), jnp.float32, -lim2, lim2)
    b2 = jax.random.uniform(k4, (1, embed_dim), jnp.float32, -lim2, lim2)
    return w1, b1, w2, b2


if __name__ == "__main__":
    key = jax.random.PRNGKey(0)
    kx1, kx2, kx3, kp = jax.random.split(key, 4)

    # Small NCHW inputs (PyTorch convention): batch=2, channels=4, spatial=16.
    B, C, Hh, Ww = 2, 4, 16, 16
    hidden, embed_dim = 32, 32
    x1 = jax.random.normal(kx1, (B, C, Hh, Ww), jnp.float32)
    x2 = jax.random.normal(kx2, (B, C, Hh, Ww), jnp.float32)
    x3 = jax.random.normal(kx3, (B, C, Hh, Ww), jnp.float32)

    params = init_params(kp, C * Hh * Ww, hidden, embed_dim)

    forward, get_embedding = make_triplet_net(params)
    o1, o2, o3 = jax.block_until_ready(forward(x1, x2, x3))
    e1 = jax.block_until_ready(get_embedding(x1))

    # Pure-JAX reference (with the same bf16 rounding the kernel applies).
    def ref_embed(x, p):
        w1, b1, w2, b2 = p
        f = lambda a: a.astype(jnp.bfloat16).astype(jnp.float32)
        xb = f(x.reshape(x.shape[0], -1))
        h = jnp.maximum(xb @ f(w1) + b1, 0.0)
        return f(h) @ f(w2) + b2

    for o, x in ((o1, x1), (o2, x2), (o3, x3), (e1, x1)):
        assert o.shape == (B, embed_dim)
        assert jnp.allclose(o, ref_embed(x, params), atol=2e-3, rtol=2e-3)

    # TODO(synk): the reference Train.py never defines `embedding_net`; a 2-layer
    # MLP embedding is used here as the concrete shared embedding network.
    print("KERNEL_OK")
</pallas_src>

<mosaic_0001>
module attributes {stable_mosaic.version = 11 : i64} {
  func.func @kernel(%arg0: i32, %arg1: i32, %arg2: memref<16x1024xf32, #tpu.memory_space<vmem>>, %arg3: memref<16x1024xf32, #tpu.memory_space<vmem>>, %arg4: memref<16x1024xf32, #tpu.memory_space<vmem>>, %arg5: memref<1024x128xbf16, #tpu.memory_space<vmem>>, %arg6: memref<1x128xf32, #tpu.memory_space<vmem>>, %arg7: memref<128x128xbf16, #tpu.memory_space<vmem>>, %arg8: memref<1x128xf32, #tpu.memory_space<vmem>>, %arg9: memref<16x128xf32, #tpu.memory_space<vmem>>, %arg10: memref<16x128xf32, #tpu.memory_space<vmem>>, %arg11: memref<16x128xf32, #tpu.memory_space<vmem>>, %arg12: memref<16x128xf32, #tpu.memory_space<vmem>>, %arg13: memref<16x128xf32, #tpu.memory_space<vmem>>, %arg14: memref<16x128xf32, #tpu.memory_space<vmem>>) attributes {dimension_semantics = [#tpu.dimension_semantics<parallel>, #tpu.dimension_semantics<arbitrary>], iteration_bounds = array<i64: 1, 1>, scalar_prefetch = 0 : i64, scratch_operands = 3 : i64, tpu.core_type = #tpu.core_type<tc>, window_params = [{transform_indices = @transform_0, window_bounds = array<i64: 16, 1024>}, {transform_indices = @transform_1, window_bounds = array<i64: 16, 1024>}, {transform_indices = @transform_2, window_bounds = array<i64: 16, 1024>}, {transform_indices = @transform_3, window_bounds = array<i64: 1024, 128>}, {pipeline_mode = #tpu.pipeline_mode<synchronous>, transform_indices = @transform_4, window_bounds = array<i64: 1, 128>}, {pipeline_mode = #tpu.pipeline_mode<synchronous>, transform_indices = @transform_5, window_bounds = array<i64: 128, 128>}, {pipeline_mode = #tpu.pipeline_mode<synchronous>, transform_indices = @transform_6, window_bounds = array<i64: 1, 128>}, {transform_indices = @transform_7, window_bounds = array<i64: 16, 128>}, {transform_indices = @transform_8, window_bounds = array<i64: 16, 128>}, {transform_indices = @transform_9, window_bounds = array<i64: 16, 128>}]} {
    %c0_i32 = arith.constant 0 : i32
    %0 = arith.cmpi eq, %arg1, %c0_i32 : i32
    %1 = arith.extui %0 : i1 to i32
    %c0_i32_0 = arith.constant 0 : i32
    %2 = arith.cmpi ne, %1, %c0_i32_0 : i32
    scf.if %2 {
      %cst_28 = arith.constant 0.000000e+00 : f32
      %27 = vector.broadcast %cst_28 : f32 to vector<16x128xf32>
      %c0_29 = arith.constant 0 : index
      %c0_30 = arith.constant 0 : index
      %28 = vector.load %arg12[%c0_29, %c0_30] : memref<16x128xf32, #tpu.memory_space<vmem>>, vector<16x128xf32>
      tpu.vector_store %arg12[%c0_29, %c0_30], %27 {strides = array<i32>} : memref<16x128xf32, #tpu.memory_space<vmem>>, vector<16x128xf32>,
      %cst_31 = arith.constant 0.000000e+00 : f32
      %29 = vector.broadcast %cst_31 : f32 to vector<16x128xf32>
      %c0_32 = arith.constant 0 : index
      %c0_33 = arith.constant 0 : index
      %30 = vector.load %arg13[%c0_32, %c0_33] : memref<16x128xf32, #tpu.memory_space<vmem>>, vector<16x128xf32>
      tpu.vector_store %arg13[%c0_32, %c0_33], %29 {strides = array<i32>} : memref<16x128xf32, #tpu.memory_space<vmem>>, vector<16x128xf32>,
      %cst_34 = arith.constant 0.000000e+00 : f32
      %31 = vector.broadcast %cst_34 : f32 to vector<16x128xf32>
      %c0_35 = arith.constant 0 : index
      %c0_36 = arith.constant 0 : index
      %32 = vector.load %arg14[%c0_35, %c0_36] : memref<16x128xf32, #tpu.memory_space<vmem>>, vector<16x128xf32>
      tpu.vector_store %arg14[%c0_35, %c0_36], %31 {strides = array<i32>} : memref<16x128xf32, #tpu.memory_space<vmem>>, vector<16x128xf32>,
    } else {
    }
    %c0 = arith.constant 0 : index
    %c0_1 = arith.constant 0 : index
    %3 = vector.load %arg12[%c0, %c0_1] : memref<16x128xf32, #tpu.memory_space<vmem>>, vector<16x128xf32>
    %c0_2 = arith.constant 0 : index
    %c0_3 = arith.constant 0 : index
    %4 = vector.load %arg2[%c0_2, %c0_3] : memref<16x1024xf32, #tpu.memory_space<vmem>>, vector<16x1024xf32>
    %5 = arith.truncf %4 : vector<16x1024xf32> to vector<16x1024xbf16>
    %c0_4 = arith.constant 0 : index
    %c0_5 = arith.constant 0 : index
    %6 = vector.load %arg5[%c0_4, %c0_5] : memref<1024x128xbf16, #tpu.memory_space<vmem>>, vector<1024x128xbf16>
    %cst = arith.constant dense<0.000000e+00> : vector<16x128xf32>
    %7 = tpu.matmul %5, %6, %cst {dimension_numbers = #tpu.dot_dimension_numbers<[1], [0], [0], [1], [0, 0, 1, 1], [], []>} : vector<16x1024xbf16>, vector<1024x128xbf16>, vector<16x128xf32> -> vector<16x128xf32>
    %8 = arith.addf %3, %7 : vector<16x128xf32>
    %c0_6 = arith.constant 0 : index
    %c0_7 = arith.constant 0 : index
    %9 = vector.load %arg12[%c0_6, %c0_7] : memref<16x128xf32, #tpu.memory_space<vmem>>, vector<16x128xf32>
    tpu.vector_store %arg12[%c0_6, %c0_7], %8 {strides = array<i32>} : memref<16x128xf32, #tpu.memory_space<vmem>>, vector<16x128xf32>,
    %c0_8 = arith.constant 0 : index
    %c0_9 = arith.constant 0 : index
    %10 = vector.load %arg13[%c0_8, %c0_9] : memref<16x128xf32, #tpu.memory_space<vmem>>, vector<16x128xf32>
    %c0_10 = arith.constant 0 : index
    %c0_11 = arith.constant 0 : index
    %11 = vector.load %arg3[%c0_10, %c0_11] : memref<16x1024xf32, #tpu.memory_space<vmem>>, vector<16x1024xf32>
    %12 = arith.truncf %11 : vector<16x1024xf32> to vector<16x1024xbf16>
    %c0_12 = arith.constant 0 : index
    %c0_13 = arith.constant 0 : index
    %13 = vector.load %arg5[%c0_12, %c0_13] : memref<1024x128xbf16, #tpu.memory_space<vmem>>, vector<1024x128xbf16>
    %cst_14 = arith.constant dense<0.000000e+00> : vector<16x128xf32>
    %14 = tpu.matmul %12, %13, %cst_14 {dimension_numbers = #tpu.dot_dimension_numbers<[1], [0], [0], [1], [0, 0, 1, 1], [], []>} : vector<16x1024xbf16>, vector<1024x128xbf16>, vector<16x128xf32> -> vector<16x128xf32>
    %15 = arith.addf %10, %14 : vector<16x128xf32>
    %c0_15 = arith.constant 0 : index
    %c0_16 = arith.constant 0 : index
    %16 = vector.load %arg13[%c0_15, %c0_16] : memref<16x128xf32, #tpu.memory_space<vmem>>, vector<16x128xf32>
    tpu.vector_store %arg13[%c0_15, %c0_16], %15 {strides = array<i32>} : memref<16x128xf32, #tpu.memory_space<vmem>>, vector<16x128xf32>,
    %c0_17 = arith.constant 0 : index
    %c0_18 = arith.constant 0 : index
    %17 = vector.load %arg14[%c0_17, %c0_18] : memref<16x128xf32, #tpu.memory_space<vmem>>, vector<16x128xf32>
    %c0_19 = arith.constant 0 : index
    %c0_20 = arith.constant 0 : index
    %18 = vector.load %arg4[%c0_19, %c0_20] : memref<16x1024xf32, #tpu.memory_space<vmem>>, vector<16x1024xf32>
    %19 = arith.truncf %18 : vector<16x1024xf32> to vector<16x1024xbf16>
    %c0_21 = arith.constant 0 : index
    %c0_22 = arith.constant 0 : index
    %20 = vector.load %arg5[%c0_21, %c0_22] : memref<1024x128xbf16, #tpu.memory_space<vmem>>, vector<1024x128xbf16>
    %cst_23 = arith.constant dense<0.000000e+00> : vector<16x128xf32>
    %21 = tpu.matmul %19, %20, %cst_23 {dimension_numbers = #tpu.dot_dimension_numbers<[1], [0], [0], [1], [0, 0, 1, 1], [], []>} : vector<16x1024xbf16>, vector<1024x128xbf16>, vector<16x128xf32> -> vector<16x128xf32>
    %22 = arith.addf %17, %21 : vector<16x128xf32>
    %c0_24 = arith.constant 0 : index
    %c0_25 = arith.constant 0 : index
    %23 = vector.load %arg14[%c0_24, %c0_25] : memref<16x128xf32, #tpu.memory_space<vmem>>, vector<16x128xf32>
    tpu.vector_store %arg14[%c0_24, %c0_25], %22 {strides = array<i32>} : memref<16x128xf32, #tpu.memory_space<vmem>>, vector<16x128xf32>,
    %c0_i32_26 = arith.constant 0 : i32
    %24 = arith.cmpi eq, %arg1, %c0_i32_26 : i32
    %25 = arith.extui %24 : i1 to i32
    %c0_i32_27 = arith.constant 0 : i32
    %26 = arith.cmpi ne, %25, %c0_i32_27 : i32
    scf.if %26 {
      %c0_28 = arith.constant 0 : index
      %c0_29 = arith.constant 0 : index
      %27 = vector.load %arg12[%c0_28, %c0_29] : memref<16x128xf32, #tpu.memory_space<vmem>>, vector<16x128xf32>
      %c0_30 = arith.constant 0 : index
      %c0_31 = arith.constant 0 : index
      %28 = vector.load %arg6[%c0_30, %c0_31] : memref<1x128xf32, #tpu.memory_space<vmem>>, vector<1x128xf32>
      %29 = vector.broadcast %28 : vector<1x128xf32> to vector<16x128xf32>
      %30 = arith.addf %27, %29 : vector<16x128xf32>
      %cst_32 = arith.constant 0.000000e+00 : f32
      %31 = vector.broadcast %cst_32 : f32 to vector<16x128xf32>
      %32 = arith.maximumf %30, %31 : vector<16x128xf32>
      %33 = arith.truncf %32 : vector<16x128xf32> to vector<16x128xbf16>
      %c0_33 = arith.constant 0 : index
      %c0_34 = arith.constant 0 : index
      %34 = vector.load %arg7[%c0_33, %c0_34] : memref<128x128xbf16, #tpu.memory_space<vmem>>, vector<128x128xbf16>
      %cst_35 = arith.constant dense<0.000000e+00> : vector<16x128xf32>
      %35 = tpu.matmul %33, %34, %cst_35 {dimension_numbers = #tpu.dot_dimension_numbers<[1], [0], [0], [1], [0, 0, 1, 1], [], []>} : vector<16x128xbf16>, vector<128x128xbf16>, vector<16x128xf32> -> vector<16x128xf32>
      %c0_36 = arith.constant 0 : index
      %c0_37 = arith.constant 0 : index
      %36 = vector.load %arg8[%c0_36, %c0_37] : memref<1x128xf32, #tpu.memory_space<vmem>>, vector<1x128xf32>
      %37 = vector.broadcast %36 : vector<1x128xf32> to vector<16x128xf32>
      %38 = arith.addf %35, %37 : vector<16x128xf32>
      %c0_38 = arith.constant 0 : index
      %c0_39 = arith.constant 0 : index
      %39 = vector.load %arg9[%c0_38, %c0_39] : memref<16x128xf32, #tpu.memory_space<vmem>>, vector<16x128xf32>
      tpu.vector_store %arg9[%c0_38, %c0_39], %38 {strides = array<i32>} : memref<16x128xf32, #tpu.memory_space<vmem>>, vector<16x128xf32>,
      %c0_40 = arith.constant 0 : index
      %c0_41 = arith.constant 0 : index
      %40 = vector.load %arg13[%c0_40, %c0_41] : memref<16x128xf32, #tpu.memory_space<vmem>>, vector<16x128xf32>
      %c0_42 = arith.constant 0 : index
      %c0_43 = arith.constant 0 : index
      %41 = vector.load %arg6[%c0_42, %c0_43] : memref<1x128xf32, #tpu.memory_space<vmem>>, vector<1x128xf32>
      %42 = vector.broadcast %41 : vector<1x128xf32> to vector<16x128xf32>
      %43 = arith.addf %40, %42 : vector<16x128xf32>
      %cst_44 = arith.constant 0.000000e+00 : f32
      %44 = vector.broadcast %cst_44 : f32 to vector<16x128xf32>
      %45 = arith.maximumf %43, %44 : vector<16x128xf32>
      %46 = arith.truncf %45 : vector<16x128xf32> to vector<16x128xbf16>
      %c0_45 = arith.constant 0 : index
      %c0_46 = arith.constant 0 : index
      %47 = vector.load %arg7[%c0_45, %c0_46] : memref<128x128xbf16, #tpu.memory_space<vmem>>, vector<128x128xbf16>
      %cst_47 = arith.constant dense<0.000000e+00> : vector<16x128xf32>
      %48 = tpu.matmul %46, %47, %cst_47 {dimension_numbers = #tpu.dot_dimension_numbers<[1], [0], [0], [1], [0, 0, 1, 1], [], []>} : vector<16x128xbf16>, vector<128x128xbf16>, vector<16x128xf32> -> vector<16x128xf32>
      %c0_48 = arith.constant 0 : index
      %c0_49 = arith.constant 0 : index
      %49 = vector.load %arg8[%c0_48, %c0_49] : memref<1x128xf32, #tpu.memory_space<vmem>>, vector<1x128xf32>
      %50 = vector.broadcast %49 : vector<1x128xf32> to vector<16x128xf32>
      %51 = arith.addf %48, %50 : vector<16x128xf32>
      %c0_50 = arith.constant 0 : index
      %c0_51 = arith.constant 0 : index
      %52 = vector.load %arg10[%c0_50, %c0_51] : memref<16x128xf32, #tpu.memory_space<vmem>>, vector<16x128xf32>
      tpu.vector_store %arg10[%c0_50, %c0_51], %51 {strides = array<i32>} : memref<16x128xf32, #tpu.memory_space<vmem>>, vector<16x128xf32>,
      %c0_52 = arith.constant 0 : index
      %c0_53 = arith.constant 0 : index
      %53 = vector.load %arg14[%c0_52, %c0_53] : memref<16x128xf32, #tpu.memory_space<vmem>>, vector<16x128xf32>
      %c0_54 = arith.constant 0 : index
      %c0_55 = arith.constant 0 : index
      %54 = vector.load %arg6[%c0_54, %c0_55] : memref<1x128xf32, #tpu.memory_space<vmem>>, vector<1x128xf32>
      %55 = vector.broadcast %54 : vector<1x128xf32> to vector<16x128xf32>
      %56 = arith.addf %53, %55 : vector<16x128xf32>
      %cst_56 = arith.constant 0.000000e+00 : f32
      %57 = vector.broadcast %cst_56 : f32 to vector<16x128xf32>
      %58 = arith.maximumf %56, %57 : vector<16x128xf32>
      %59 = arith.truncf %58 : vector<16x128xf32> to vector<16x128xbf16>
      %c0_57 = arith.constant 0 : index
      %c0_58 = arith.constant 0 : index
      %60 = vector.load %arg7[%c0_57, %c0_58] : memref<128x128xbf16, #tpu.memory_space<vmem>>, vector<128x128xbf16>
      %cst_59 = arith.constant dense<0.000000e+00> : vector<16x128xf32>
      %61 = tpu.matmul %59, %60, %cst_59 {dimension_numbers = #tpu.dot_dimension_numbers<[1], [0], [0], [1], [0, 0, 1, 1], [], []>} : vector<16x128xbf16>, vector<128x128xbf16>, vector<16x128xf32> -> vector<16x128xf32>
      %c0_60 = arith.constant 0 : index
      %c0_61 = arith.constant 0 : index
      %62 = vector.load %arg8[%c0_60, %c0_61] : memref<1x128xf32, #tpu.memory_space<vmem>>, vector<1x128xf32>
      %63 = vector.broadcast %62 : vector<1x128xf32> to vector<16x128xf32>
      %64 = arith.addf %61, %63 : vector<16x128xf32>
      %c0_62 = arith.constant 0 : index
      %c0_63 = arith.constant 0 : index
      %65 = vector.load %arg11[%c0_62, %c0_63] : memref<16x128xf32, #tpu.memory_space<vmem>>, vector<16x128xf32>
      tpu.vector_store %arg11[%c0_62, %c0_63], %64 {strides = array<i32>} : memref<16x128xf32, #tpu.memory_space<vmem>>, vector<16x128xf32>,
    } else {
    }
    return
  }
  func.func @transform_0(%arg0: i32, %arg1: i32) -> (i32, i32) {
    %c0_i32 = arith.constant 0 : i32
    return %arg0, %arg1 : i32, i32
  }
  func.func @transform_1(%arg0: i32, %arg1: i32) -> (i32, i32) {
    %c0_i32 = arith.constant 0 : i32
    return %arg0, %arg1 : i32, i32
  }
  func.func @transform_2(%arg0: i32, %arg1: i32) -> (i32, i32) {
    %c0_i32 = arith.constant 0 : i32
    return %arg0, %arg1 : i32, i32
  }
  func.func @transform_3(%arg0: i32, %arg1: i32) -> (i32, i32) {
    %c0_i32 = arith.constant 0 : i32
    %c0_i32_0 = arith.constant 0 : i32
    return %arg1, %c0_i32 : i32, i32
  }
  func.func @transform_4(%arg0: i32, %arg1: i32) -> (i32, i32) {
    %c0_i32 = arith.constant 0 : i32
    %c0_i32_0 = arith.constant 0 : i32
    %c0_i32_1 = arith.constant 0 : i32
    return %c0_i32, %c0_i32_0 : i32, i32
  }
  func.func @transform_5(%arg0: i32, %arg1: i32) -> (i32, i32) {
    %c0_i32 = arith.constant 0 : i32
    %c0_i32_0 = arith.constant 0 : i32
    %c0_i32_1 = arith.constant 0 : i32
    return %c0_i32, %c0_i32_0 : i32, i32
  }
  func.func @transform_6(%arg0: i32, %arg1: i32) -> (i32, i32) {
    %c0_i32 = arith.constant 0 : i32
    %c0_i32_0 = arith.constant 0 : i32
    %c0_i32_1 = arith.constant 0 : i32
    return %c0_i32, %c0_i32_0 : i32, i32
  }
  func.func @transform_7(%arg0: i32, %arg1: i32) -> (i32, i32) {
    %c0_i32 = arith.constant 0 : i32
    %c0_i32_0 = arith.constant 0 : i32
    return %arg0, %c0_i32 : i32, i32
  }
  func.func @transform_8(%arg0: i32, %arg1: i32) -> (i32, i32) {
    %c0_i32 = arith.constant 0 : i32
    %c0_i32_0 = arith.constant 0 : i32
    return %arg0, %c0_i32 : i32, i32
  }
  func.func @transform_9(%arg0: i32, %arg1: i32) -> (i32, i32) {
    %c0_i32 = arith.constant 0 : i32
    %c0_i32_0 = arith.constant 0 : i32
    return %arg0, %c0_i32 : i32, i32
  }
}

</mosaic_0001>

<llo_original>
// kernel: _fwd.1
$region0: #{_fwd.1}
  #allocation0 [shape = 'u32[]', space=smem, size = 0x4, offset = 0x4, fixed_abs, tag = 'smem constant byte address 0x4 - core index']
  #allocation1 [shape = 'u32[144,128]{1,0:T(1,128)}', space=vmem, size = 0x12000, scoped, tag = 'internal scratch']
  #allocation2 [shape = 'f32[16,128]{1,0:T(8,128)}', space=vmem, size = 0x2000, scoped, tag = 'scratch operand']
  #allocation3 [shape = 'f32[16,128]{1,0:T(8,128)}', space=vmem, size = 0x2000, scoped, tag = 'scratch operand']
  #allocation4 [shape = 'f32[16,128]{1,0:T(8,128)}', space=vmem, size = 0x2000, scoped, tag = 'scratch operand']
  %s0 = inlined_call_operand.vmem [shape: f32[16,1024], index: 0, kind: input, shape index: {}]
  %s1 = inlined_call_operand.vmem [shape: f32[16,1024], index: 1, kind: input, shape index: {}]
  %s2 = inlined_call_operand.vmem [shape: f32[16,1024], index: 2, kind: input, shape index: {}]
  %s3 = inlined_call_operand.vmem [shape: bf16[1024,128], index: 3, kind: input, shape index: {}]
  %s4 = inlined_call_operand.vmem [shape: f32[1,128], index: 4, kind: input, shape index: {}]
  %s5 = inlined_call_operand.vmem [shape: bf16[128,128], index: 5, kind: input, shape index: {}]
  %s6 = inlined_call_operand.vmem [shape: f32[1,128], index: 6, kind: input, shape index: {}]
  %s7 = inlined_call_operand.vmem [shape: f32[16,128], index: 7, kind: output, shape index: {0}]
  %s8 = inlined_call_operand.vmem [shape: f32[16,128], index: 8, kind: output, shape index: {1}]
  %s9 = inlined_call_operand.vmem [shape: f32[16,128], index: 9, kind: output, shape index: {2}]
  %10 = xla_tuple %s7, %s8, %s9
  %s11 = sld [smem:[#allocation0]]
  $region62: #{_fwd.1} parent=0
    _
  %s13 = ssub.s32 1, %s11
  %s14 = scalar_select 0, %s13, %s11
  // Predicated region
  $region2: #{_fwd.1} parent=0 // pred_check
    _
  $region3: #{_fwd.1} parent=0 // pred_check_branch
    %16 = sbr.rel (0) target = $region5
  $region4: #{_fwd.1} parent=0 // pred_region
    _
  $region5: #{_fwd.1} parent=0 // pred_fallthru
    _
  // Predicated region
  $region6: #{_fwd.1} parent=0 // pred_check
    _
  $region7: #{_fwd.1} parent=0 // pred_check_branch
    %18 = sbr.rel (0) target = $region9
  $region8: #{_fwd.1} parent=0 // pred_region
    _
  $region9: #{_fwd.1} parent=0 // pred_fallthru
    _
  // Predicated region
  $region10: #{_fwd.1} parent=0 // pred_check
    _
  $region11: #{_fwd.1} parent=0 // pred_check_branch
    %20 = sbr.rel (0) target = $region13
  $region12: #{_fwd.1} parent=0 // pred_region
    _
  $region13: #{_fwd.1} parent=0 // pred_fallthru
    _
  // Predicated region
  $region14: #{_fwd.1} parent=0 // pred_check
    _
  $region15: #{_fwd.1} parent=0 // pred_check_branch
    %22 = sbr.rel (0) target = $region17
  $region16: #{_fwd.1} parent=0 // pred_region
    _
  $region17: #{_fwd.1} parent=0 // pred_fallthru
    _
  // Predicated region
  $region18: #{_fwd.1} parent=0 // pred_check
    _
  $region19: #{_fwd.1} parent=0 // pred_check_branch
    %24 = sbr.rel (0) target = $region21
  $region20: #{_fwd.1} parent=0 // pred_region
    _
  $region21: #{_fwd.1} parent=0 // pred_fallthru
    _
  // Predicated region
  $region22: #{_fwd.1} parent=0 // pred_check
    _
  $region23: #{_fwd.1} parent=0 // pred_check_branch
    %26 = sbr.rel (0) target = $region25
  $region24: #{_fwd.1} parent=0 // pred_region
    _
  $region25: #{_fwd.1} parent=0 // pred_fallthru
    _
  // Predicated region
  $region26: #{_fwd.1} parent=0 // pred_check
    _
  $region27: #{_fwd.1} parent=0 // pred_check_branch
    %28 = sbr.rel (0) target = $region29
  $region28: #{_fwd.1} parent=0 // pred_region
    _
  $region29: #{_fwd.1} parent=0 // pred_fallthru
    _
  %p30 = scmp.eq.s32.totalorder 0, 0
  // Predicated region
  $region30: #{_fwd.1} parent=0 // pred_check
    %p31 = pneg %p30
  $region31: #{_fwd.1} parent=0 // pred_check_branch
    %33 = sbr.rel (%p31) target = $region33
  $region32: #{_fwd.1} parent=0 // pred_region
    %34 = vst [vmem:[#allocation2] sm:$0xff] 0.0
    %35 = vst [vmem:[#allocation2 + $0x8] sm:$0xff] 0.0
    %36 = vst [vmem:[#allocation3] sm:$0xff] 0.0
    %37 = vst [vmem:[#allocation3 + $0x8] sm:$0xff] 0.0
    %38 = vst [vmem:[#allocation4] sm:$0xff] 0.0
    %39 = vst [vmem:[#allocation4 + $0x8] sm:$0xff] 0.0
  $region33: #{_fwd.1} parent=0 // pred_fallthru
    _
  %v40 = vld [vmem:[#allocation2] sm:$0xff]
  %v41 = vld [vmem:[#allocation2 + $0x8] sm:$0xff]
  %v42 = vld [vmem:[%s0] sm:$0xff]
  %v43 = vld [vmem:[%s0 + $0x8] sm:$0xff]
  %v44 = vld [vmem:[%s0 + $0x10] sm:$0xff]
  %v45 = vld [vmem:[%s0 + $0x18] sm:$0xff]
  %v46 = vld [vmem:[%s0 + $0x20] sm:$0xff]
  %v47 = vld [vmem:[%s0 + $0x28] sm:$0xff]
  %v48 = vld [vmem:[%s0 + $0x30] sm:$0xff]
  %v49 = vld [vmem:[%s0 + $0x38] sm:$0xff]
  %v50 = vld [vmem:[%s0 + $0x40] sm:$0xff]
  %v51 = vld [vmem:[%s0 + $0x48] sm:$0xff]
  %v52 = vld [vmem:[%s0 + $0x50] sm:$0xff]
  %v53 = vld [vmem:[%s0 + $0x58] sm:$0xff]
  %v54 = vld [vmem:[%s0 + $0x60] sm:$0xff]
  %v55 = vld [vmem:[%s0 + $0x68] sm:$0xff]
  %v56 = vld [vmem:[%s0 + $0x70] sm:$0xff]
  %v57 = vld [vmem:[%s0 + $0x78] sm:$0xff]
  %v58 = vpack.c.bf16 %v50, %v42
  %v59 = vpack.c.bf16 %v51, %v43
  %v60 = vpack.c.bf16 %v52, %v44
  %v61 = vpack.c.bf16 %v53, %v45
  %v62 = vpack.c.bf16 %v54, %v46
  %v63 = vpack.c.bf16 %v55, %v47
  %v64 = vpack.c.bf16 %v56, %v48
  %v65 = vpack.c.bf16 %v57, %v49
  %v66 = vld [vmem:[%s3] sm:$0xf]
  %v67 = vld [vmem:[%s3 + $0x4] sm:$0xf]
  %v68 = vld [vmem:[%s3 + $0x8] sm:$0xf]
  %v69 = vld [vmem:[%s3 + $0xc] sm:$0xf]
  %v70 = vld [vmem:[%s3 + $0x10] sm:$0xf]
  %v71 = vld [vmem:[%s3 + $0x14] sm:$0xf]
  %v72 = vld [vmem:[%s3 + $0x18] sm:$0xf]
  %v73 = vld [vmem:[%s3 + $0x1c] sm:$0xf]
  %v74 = vld [vmem:[%s3 + $0x20] sm:$0xf]
  %v75 = vld [vmem:[%s3 + $0x24] sm:$0xf]
  %v76 = vld [vmem:[%s3 + $0x28] sm:$0xf]
  %v77 = vld [vmem:[%s3 + $0x2c] sm:$0xf]
  %v78 = vld [vmem:[%s3 + $0x30] sm:$0xf]
  %v79 = vld [vmem:[%s3 + $0x34] sm:$0xf]
  %v80 = vld [vmem:[%s3 + $0x38] sm:$0xf]
  %v81 = vld [vmem:[%s3 + $0x3c] sm:$0xf]
  %v82 = vld [vmem:[%s3 + $0x40] sm:$0xf]
  %v83 = vld [vmem:[%s3 + $0x44] sm:$0xf]
  %v84 = vld [vmem:[%s3 + $0x48] sm:$0xf]
  %v85 = vld [vmem:[%s3 + $0x4c] sm:$0xf]
  %v86 = vld [vmem:[%s3 + $0x50] sm:$0xf]
  %v87 = vld [vmem:[%s3 + $0x54] sm:$0xf]
  %v88 = vld [vmem:[%s3 + $0x58] sm:$0xf]
  %v89 = vld [vmem:[%s3 + $0x5c] sm:$0xf]
  %v90 = vld [vmem:[%s3 + $0x60] sm:$0xf]
  %v91 = vld [vmem:[%s3 + $0x64] sm:$0xf]
  %v92 = vld [vmem:[%s3 + $0x68] sm:$0xf]
  %v93 = vld [vmem:[%s3 + $0x6c] sm:$0xf]
  %v94 = vld [vmem:[%s3 + $0x70] sm:$0xf]
  %v95 = vld [vmem:[%s3 + $0x74] sm:$0xf]
  %v96 = vld [vmem:[%s3 + $0x78] sm:$0xf]
  %v97 = vld [vmem:[%s3 + $0x7c] sm:$0xf]
  %v98 = vld [vmem:[%s3 + $0x80] sm:$0xf]
  %v99 = vld [vmem:[%s3 + $0x84] sm:$0xf]
  %v100 = vld [vmem:[%s3 + $0x88] sm:$0xf]
  %v101 = vld [vmem:[%s3 + $0x8c] sm:$0xf]
  %v102 = vld [vmem:[%s3 + $0x90] sm:$0xf]
  %v103 = vld [vmem:[%s3 + $0x94] sm:$0xf]
  %v104 = vld [vmem:[%s3 + $0x98] sm:$0xf]
  %v105 = vld [vmem:[%s3 + $0x9c] sm:$0xf]
  %v106 = vld [vmem:[%s3 + $0xa0] sm:$0xf]
  %v107 = vld [vmem:[%s3 + $0xa4] sm:$0xf]
  %v108 = vld [vmem:[%s3 + $0xa8] sm:$0xf]
  %v109 = vld [vmem:[%s3 + $0xac] sm:$0xf]
  %v110 = vld [vmem:[%s3 + $0xb0] sm:$0xf]
  %v111 = vld [vmem:[%s3 + $0xb4] sm:$0xf]
  %v112 = vld [vmem:[%s3 + $0xb8] sm:$0xf]
  %v113 = vld [vmem:[%s3 + $0xbc] sm:$0xf]
  %v114 = vld [vmem:[%s3 + $0xc0] sm:$0xf]
  %v115 = vld [vmem:[%s3 + $0xc4] sm:$0xf]
  %v116 = vld [vmem:[%s3 + $0xc8] sm:$0xf]
  %v117 = vld [vmem:[%s3 + $0xcc] sm:$0xf]
  %v118 = vld [vmem:[%s3 + $0xd0] sm:$0xf]
  %v119 = vld [vmem:[%s3 + $0xd4] sm:$0xf]
  %v120 = vld [vmem:[%s3 + $0xd8] sm:$0xf]
  %v121 = vld [vmem:[%s3 + $0xdc] sm:$0xf]
  %v122 = vld [vmem:[%s3 + $0xe0] sm:$0xf]
  %v123 = vld [vmem:[%s3 + $0xe4] sm:$0xf]
  %v124 = vld [vmem:[%s3 + $0xe8] sm:$0xf]
  %v125 = vld [vmem:[%s3 + $0xec] sm:$0xf]
  %v126 = vld [vmem:[%s3 + $0xf0] sm:$0xf]
  %v127 = vld [vmem:[%s3 + $0xf4] sm:$0xf]
  %v128 = vld [vmem:[%s3 + $0xf8] sm:$0xf]
  %v129 = vld [vmem:[%s3 + $0xfc] sm:$0xf]
  %v130 = vld [vmem:[%s3 + $0x100] sm:$0xf]
  %v131 = vld [vmem:[%s3 + $0x104] sm:$0xf]
  %v132 = vld [vmem:[%s3 + $0x108] sm:$0xf]
  %v133 = vld [vmem:[%s3 + $0x10c] sm:$0xf]
  %v134 = vld [vmem:[%s3 + $0x110] sm:$0xf]
  %v135 = vld [vmem:[%s3 + $0x114] sm:$0xf]
  %v136 = vld [vmem:[%s3 + $0x118] sm:$0xf]
  %v137 = vld [vmem:[%s3 + $0x11c] sm:$0xf]
  %v138 = vld [vmem:[%s3 + $0x120] sm:$0xf]
  %v139 = vld [vmem:[%s3 + $0x124] sm:$0xf]
  %v140 = vld [vmem:[%s3 + $0x128] sm:$0xf]
  %v141 = vld [vmem:[%s3 + $0x12c] sm:$0xf]
  %v142 = vld [vmem:[%s3 + $0x130] sm:$0xf]
  %v143 = vld [vmem:[%s3 + $0x134] sm:$0xf]
  %v144 = vld [vmem:[%s3 + $0x138] sm:$0xf]
  %v145 = vld [vmem:[%s3 + $0x13c] sm:$0xf]
  %v146 = vld [vmem:[%s3 + $0x140] sm:$0xf]
  %v147 = vld [vmem:[%s3 + $0x144] sm:$0xf]
  %v148 = vld [vmem:[%s3 + $0x148] sm:$0xf]
  %v149 = vld [vmem:[%s3 + $0x14c] sm:$0xf]
  %v150 = vld [vmem:[%s3 + $0x150] sm:$0xf]
  %v151 = vld [vmem:[%s3 + $0x154] sm:$0xf]
  %v152 = vld [vmem:[%s3 + $0x158] sm:$0xf]
  %v153 = vld [vmem:[%s3 + $0x15c] sm:$0xf]
  %v154 = vld [vmem:[%s3 + $0x160] sm:$0xf]
  %v155 = vld [vmem:[%s3 + $0x164] sm:$0xf]
  %v156 = vld [vmem:[%s3 + $0x168] sm:$0xf]
  %v157 = vld [vmem:[%s3 + $0x16c] sm:$0xf]
  %v158 = vld [vmem:[%s3 + $0x170] sm:$0xf]
  %v159 = vld [vmem:[%s3 + $0x174] sm:$0xf]
  %v160 = vld [vmem:[%s3 + $0x178] sm:$0xf]
  %v161 = vld [vmem:[%s3 + $0x17c] sm:$0xf]
  %v162 = vld [vmem:[%s3 + $0x180] sm:$0xf]
  %v163 = vld [vmem:[%s3 + $0x184] sm:$0xf]
  %v164 = vld [vmem:[%s3 + $0x188] sm:$0xf]
  %v165 = vld [vmem:[%s3 + $0x18c] sm:$0xf]
  %v166 = vld [vmem:[%s3 + $0x190] sm:$0xf]
  %v167 = vld [vmem:[%s3 + $0x194] sm:$0xf]
  %v168 = vld [vmem:[%s3 + $0x198] sm:$0xf]
  %v169 = vld [vmem:[%s3 + $0x19c] sm:$0xf]
  %v170 = vld [vmem:[%s3 + $0x1a0] sm:$0xf]
  %v171 = vld [vmem:[%s3 + $0x1a4] sm:$0xf]
  %v172 = vld [vmem:[%s3 + $0x1a8] sm:$0xf]
  %v173 = vld [vmem:[%s3 + $0x1ac] sm:$0xf]
  %v174 = vld [vmem:[%s3 + $0x1b0] sm:$0xf]
  %v175 = vld [vmem:[%s3 + $0x1b4] sm:$0xf]
  %v176 = vld [vmem:[%s3 + $0x1b8] sm:$0xf]
  %v177 = vld [vmem:[%s3 + $0x1bc] sm:$0xf]
  %v178 = vld [vmem:[%s3 + $0x1c0] sm:$0xf]
  %v179 = vld [vmem:[%s3 + $0x1c4] sm:$0xf]
  %v180 = vld [vmem:[%s3 + $0x1c8] sm:$0xf]
  %v181 = vld [vmem:[%s3 + $0x1cc] sm:$0xf]
  %v182 = vld [vmem:[%s3 + $0x1d0] sm:$0xf]
  %v183 = vld [vmem:[%s3 + $0x1d4] sm:$0xf]
  %v184 = vld [vmem:[%s3 + $0x1d8] sm:$0xf]
  %v185 = vld [vmem:[%s3 + $0x1dc] sm:$0xf]
  %v186 = vld [vmem:[%s3 + $0x1e0] sm:$0xf]
  %v187 = vld [vmem:[%s3 + $0x1e4] sm:$0xf]
  %v188 = vld [vmem:[%s3 + $0x1e8] sm:$0xf]
  %v189 = vld [vmem:[%s3 + $0x1ec] sm:$0xf]
  %v190 = vld [vmem:[%s3 + $0x1f0] sm:$0xf]
  %v191 = vld [vmem:[%s3 + $0x1f4] sm:$0xf]
  %v192 = vld [vmem:[%s3 + $0x1f8] sm:$0xf]
  %v193 = vld [vmem:[%s3 + $0x1fc] sm:$0xf]
  %v322 = vunpack.c.l.b16 %v66
  %v323 = vunpack.c.l.b16 %v67
  %v324 = vunpack.c.l.b16 %v68
  %v325 = vunpack.c.l.b16 %v69
  %v326 = vunpack.c.l.b16 %v70
  %v327 = vunpack.c.l.b16 %v71
  %v328 = vunpack.c.l.b16 %v72
  %v329 = vunpack.c.l.b16 %v73
  %v330 = vunpack.c.l.b16 %v74
  %v331 = vunpack.c.l.b16 %v75
  %v332 = vunpack.c.l.b16 %v76
  %v333 = vunpack.c.l.b16 %v77
  %v334 = vunpack.c.l.b16 %v78
  %v335 = vunpack.c.l.b16 %v79
  %v336 = vunpack.c.l.b16 %v80
  %v337 = vunpack.c.l.b16 %v81
  %v338 = vunpack.c.l.b16 %v82
  %v339 = vunpack.c.l.b16 %v83
  %v340 = vunpack.c.l.b16 %v84
  %v341 = vunpack.c.l.b16 %v85
  %v342 = vunpack.c.l.b16 %v86
  %v343 = vunpack.c.l.b16 %v87
  %v344 = vunpack.c.l.b16 %v88
  %v345 = vunpack.c.l.b16 %v89
  %v346 = vunpack.c.l.b16 %v90
  %v347 = vunpack.c.l.b16 %v91
  %v348 = vunpack.c.l.b16 %v92
  %v349 = vunpack.c.l.b16 %v93
  %v350 = vunpack.c.l.b16 %v94
  %v351 = vunpack.c.l.b16 %v95
  %v352 = vunpack.c.l.b16 %v96
  %v353 = vunpack.c.l.b16 %v97
  %v354 = vunpack.c.l.b16 %v98
  %v355 = vunpack.c.l.b16 %v99
  %v356 = vunpack.c.l.b16 %v100
  %v357 = vunpack.c.l.b16 %v101
  %v358 = vunpack.c.l.b16 %v102
  %v359 = vunpack.c.l.b16 %v103
  %v360 = vunpack.c.l.b16 %v104
  %v361 = vunpack.c.l.b16 %v105
  %v362 = vunpack.c.l.b16 %v106
  %v363 = vunpack.c.l.b16 %v107
  %v364 = vunpack.c.l.b16 %v108
  %v365 = vunpack.c.l.b16 %v109
  %v366 = vunpack.c.l.b16 %v110
  %v367 = vunpack.c.l.b16 %v111
  %v368 = vunpack.c.l.b16 %v112
  %v369 = vunpack.c.l.b16 %v113
  %v370 = vunpack.c.l.b16 %v114
  %v371 = vunpack.c.l.b16 %v115
  %v372 = vunpack.c.l.b16 %v116
  %v373 = vunpack.c.l.b16 %v117
  %v374 = vunpack.c.l.b16 %v118
  %v375 = vunpack.c.l.b16 %v119
  %v376 = vunpack.c.l.b16 %v120
  %v377 = vunpack.c.l.b16 %v121
  %v378 = vunpack.c.l.b16 %v122
  %v379 = vunpack.c.l.b16 %v123
  %v380 = vunpack.c.l.b16 %v124
  %v381 = vunpack.c.l.b16 %v125
  %v382 = vunpack.c.l.b16 %v126
  %v383 = vunpack.c.l.b16 %v127
  %v384 = vunpack.c.l.b16 %v128
  %v385 = vunpack.c.l.b16 %v129
  %v386 = vunpack.c.l.b16 %v130
  %v387 = vunpack.c.l.b16 %v131
  %v388 = vunpack.c.l.b16 %v132
  %v389 = vunpack.c.l.b16 %v133
  %v390 = vunpack.c.l.b16 %v134
  %v391 = vunpack.c.l.b16 %v135
  %v392 = vunpack.c.l.b16 %v136
  %v393 = vunpack.c.l.b16 %v137
  %v394 = vunpack.c.l.b16 %v138
  %v395 = vunpack.c.l.b16 %v139
  %v396 = vunpack.c.l.b16 %v140
  %v397 = vunpack.c.l.b16 %v141
  %v398 = vunpack.c.l.b16 %v142
  %v399 = vunpack.c.l.b16 %v143
  %v400 = vunpack.c.l.b16 %v144
  %v401 = vunpack.c.l.b16 %v145
  %v402 = vunpack.c.l.b16 %v146
  %v403 = vunpack.c.l.b16 %v147
  %v404 = vunpack.c.l.b16 %v148
  %v405 = vunpack.c.l.b16 %v149
  %v406 = vunpack.c.l.b16 %v150
  %v407 = vunpack.c.l.b16 %v151
  %v408 = vunpack.c.l.b16 %v152
  %v409 = vunpack.c.l.b16 %v153
  %v410 = vunpack.c.l.b16 %v154
  %v411 = vunpack.c.l.b16 %v155
  %v412 = vunpack.c.l.b16 %v156
  %v413 = vunpack.c.l.b16 %v157
  %v414 = vunpack.c.l.b16 %v158
  %v415 = vunpack.c.l.b16 %v159
  %v416 = vunpack.c.l.b16 %v160
  %v417 = vunpack.c.l.b16 %v161
  %v418 = vunpack.c.l.b16 %v162
  %v419 = vunpack.c.l.b16 %v163
  %v420 = vunpack.c.l.b16 %v164
  %v421 = vunpack.c.l.b16 %v165
  %v422 = vunpack.c.l.b16 %v166
  %v423 = vunpack.c.l.b16 %v167
  %v424 = vunpack.c.l.b16 %v168
  %v425 = vunpack.c.l.b16 %v169
  %v426 = vunpack.c.l.b16 %v170
  %v427 = vunpack.c.l.b16 %v171
  %v428 = vunpack.c.l.b16 %v172
  %v429 = vunpack.c.l.b16 %v173
  %v430 = vunpack.c.l.b16 %v174
  %v431 = vunpack.c.l.b16 %v175
  %v432 = vunpack.c.l.b16 %v176
  %v433 = vunpack.c.l.b16 %v177
  %v434 = vunpack.c.l.b16 %v178
  %v435 = vunpack.c.l.b16 %v179
  %v436 = vunpack.c.l.b16 %v180
  %v437 = vunpack.c.l.b16 %v181
  %v438 = vunpack.c.l.b16 %v182
  %v439 = vunpack.c.l.b16 %v183
  %v440 = vunpack.c.l.b16 %v184
  %v441 = vunpack.c.l.b16 %v185
  %v442 = vunpack.c.l.b16 %v186
  %v443 = vunpack.c.l.b16 %v187
  %v444 = vunpack.c.l.b16 %v188
  %v445 = vunpack.c.l.b16 %v189
  %v446 = vunpack.c.l.b16 %v190
  %v447 = vunpack.c.l.b16 %v191
  %v448 = vunpack.c.l.b16 %v192
  %v449 = vunpack.c.l.b16 %v193
  %v450 = vpack.c.b16 %v323, %v322
  %v451 = vpack.c.b16 %v325, %v324
  %v452 = vpack.c.b16 %v327, %v326
  %v453 = vpack.c.b16 %v329, %v328
  %v454 = vpack.c.b16 %v331, %v330
  %v455 = vpack.c.b16 %v333, %v332
  %v456 = vpack.c.b16 %v335, %v334
  %v457 = vpack.c.b16 %v337, %v336
  %v458 = vpack.c.b16 %v339, %v338
  %v459 = vpack.c.b16 %v341, %v340
  %v460 = vpack.c.b16 %v343, %v342
  %v461 = vpack.c.b16 %v345, %v344
  %v462 = vpack.c.b16 %v347, %v346
  %v463 = vpack.c.b16 %v349, %v348
  %v464 = vpack.c.b16 %v351, %v350
  %v465 = vpack.c.b16 %v353, %v352
  %v466 = vpack.c.b16 %v355, %v354
  %v467 = vpack.c.b16 %v357, %v356
  %v468 = vpack.c.b16 %v359, %v358
  %v469 = vpack.c.b16 %v361, %v360
  %v470 = vpack.c.b16 %v363, %v362
  %v471 = vpack.c.b16 %v365, %v364
  %v472 = vpack.c.b16 %v367, %v366
  %v473 = vpack.c.b16 %v369, %v368
  %v474 = vpack.c.b16 %v371, %v370
  %v475 = vpack.c.b16 %v373, %v372
  %v476 = vpack.c.b16 %v375, %v374
  %v477 = vpack.c.b16 %v377, %v376
  %v478 = vpack.c.b16 %v379, %v378
  %v479 = vpack.c.b16 %v381, %v380
  %v480 = vpack.c.b16 %v383, %v382
  %v481 = vpack.c.b16 %v385, %v384
  %v482 = vpack.c.b16 %v387, %v386
  %v483 = vpack.c.b16 %v389, %v388
  %v484 = vpack.c.b16 %v391, %v390
  %v485 = vpack.c.b16 %v393, %v392
  %v486 = vpack.c.b16 %v395, %v394
  %v487 = vpack.c.b16 %v397, %v396
  %v488 = vpack.c.b16 %v399, %v398
  %v489 = vpack.c.b16 %v401, %v400
  %v490 = vpack.c.b16 %v403, %v402
  %v491 = vpack.c.b16 %v405, %v404
  %v492 = vpack.c.b16 %v407, %v406
  %v493 = vpack.c.b16 %v409, %v408
  %v494 = vpack.c.b16 %v411, %v410
  %v495 = vpack.c.b16 %v413, %v412
  %v496 = vpack.c.b16 %v415, %v414
  %v497 = vpack.c.b16 %v417, %v416
  %v498 = vpack.c.b16 %v419, %v418
  %v499 = vpack.c.b16 %v421, %v420
  %v500 = vpack.c.b16 %v423, %v422
  %v501 = vpack.c.b16 %v425, %v424
  %v502 = vpack.c.b16 %v427, %v426
  %v503 = vpack.c.b16 %v429, %v428
  %v504 = vpack.c.b16 %v431, %v430
  %v505 = vpack.c.b16 %v433, %v432
  %v506 = vpack.c.b16 %v435, %v434
  %v507 = vpack.c.b16 %v437, %v436
  %v508 = vpack.c.b16 %v439, %v438
  %v509 = vpack.c.b16 %v441, %v440
  %v510 = vpack.c.b16 %v443, %v442
  %v511 = vpack.c.b16 %v445, %v444
  %v512 = vpack.c.b16 %v447, %v446
  %v513 = vpack.c.b16 %v449, %v448
  %578 = vmatprep.subr.bf16.mxu0 0
  %579 = vmatpush1.bf16.msra.mxu0 %v450
  %580 = vmatprep.subr.bf16.mxu0 0
  %581 = vmatpush1.bf16.msra.mxu0 %v451
  %582 = vmatprep.subr.bf16.mxu0 0
  %583 = vmatpush1.bf16.msra.mxu0 %v452
  %584 = vmatprep.subr.bf16.mxu0 0
  %585 = vmatpush1.bf16.msra.mxu0 %v453
  %586 = vmatprep.subr.bf16.mxu0 0
  %587 = vmatpush1.bf16.msra.mxu0 %v454
  %588 = vmatprep.subr.bf16.mxu0 0
  %589 = vmatpush1.bf16.msra.mxu0 %v455
  %590 = vmatprep.subr.bf16.mxu0 0
  %591 = vmatpush1.bf16.msra.mxu0 %v456
  %592 = vmatprep.subr.bf16.mxu0 0
  %593 = vmatpush1.bf16.msra.mxu0 %v457
  %594 = vmatprep.subr.bf16.mxu0 0
  %595 = vmatpush1.bf16.msra.mxu0 %v458
  %596 = vmatprep.subr.bf16.mxu0 0
  %597 = vmatpush1.bf16.msra.mxu0 %v459
  %598 = vmatprep.subr.bf16.mxu0 0
  %599 = vmatpush1.bf16.msra.mxu0 %v460
  %600 = vmatprep.subr.bf16.mxu0 0
  %601 = vmatpush1.bf16.msra.mxu0 %v461
  %602 = vmatprep.subr.bf16.mxu0 0
  %603 = vmatpush1.bf16.msra.mxu0 %v462
  %604 = vmatprep.subr.bf16.mxu0 0
  %605 = vmatpush1.bf16.msra.mxu0 %v463
  %606 = vmatprep.subr.bf16.mxu0 0
  %607 = vmatpush1.bf16.msra.mxu0 %v464
  %608 = vmatprep.subr.bf16.mxu0 0
  %609 = vmatpush1.bf16.msra.mxu0 %v465
  %610 = vmatprep.mubr.bf16.mxu0 %v59
  %611 = vmatmul.mubr.bf16.gmra.mrb[0].mxu0 %v58
  %v612 = vpop.f32.mrb[0].mxu0
  %v613 = vadd.f32 0.0, %v612
  %v614 = vpop.f32.mrb[0].mxu0
  %v615 = vpop.f32.mrb[0].mxu0
  %v616 = vadd.f32 0.0, %v615
  %v617 = vpop.f32.mrb[0].mxu0
  %618 = vdwg.mxu0
  %619 = vmatprep.subr.bf16.mxu0 0
  %620 = vmatpush1.bf16.msra.mxu0 %v466
  %621 = vmatprep.subr.bf16.mxu0 0
  %622 = vmatpush1.bf16.msra.mxu0 %v467
  %623 = vmatprep.subr.bf16.mxu0 0
  %624 = vmatpush1.bf16.msra.mxu0 %v468
  %625 = vmatprep.subr.bf16.mxu0 0
  %626 = vmatpush1.bf16.msra.mxu0 %v469
  %627 = vmatprep.subr.bf16.mxu0 0
  %628 = vmatpush1.bf16.msra.mxu0 %v470
  %629 = vmatprep.subr.bf16.mxu0 0
  %630 = vmatpush1.bf16.msra.mxu0 %v471
  %631 = vmatprep.subr.bf16.mxu0 0
  %632 = vmatpush1.bf16.msra.mxu0 %v472
  %633 = vmatprep.subr.bf16.mxu0 0
  %634 = vmatpush1.bf16.msra.mxu0 %v473
  %635 = vmatprep.subr.bf16.mxu0 0
  %636 = vmatpush1.bf16.msra.mxu0 %v474
  %637 = vmatprep.subr.bf16.mxu0 0
  %638 = vmatpush1.bf16.msra.mxu0 %v475
  %639 = vmatprep.subr.bf16.mxu0 0
  %640 = vmatpush1.bf16.msra.mxu0 %v476
  %641 = vmatprep.subr.bf16.mxu0 0
  %642 = vmatpush1.bf16.msra.mxu0 %v477
  %643 = vmatprep.subr.bf16.mxu0 0
  %644 = vmatpush1.bf16.msra.mxu0 %v478
  %645 = vmatprep.subr.bf16.mxu0 0
  %646 = vmatpush1.bf16.msra.mxu0 %v479
  %647 = vmatprep.subr.bf16.mxu0 0
  %648 = vmatpush1.bf16.msra.mxu0 %v480
  %649 = vmatprep.subr.bf16.mxu0 0
  %650 = vmatpush1.bf16.msra.mxu0 %v481
  %651 = vmatprep.mubr.bf16.mxu0 %v61
  %652 = vmatmul.mubr.bf16.gmra.mrb[0].mxu0 %v60
  %v653 = vpop.f32.mrb[0].mxu0
  %v654 = vadd.f32 %v613, %v653
  %v655 = vpop.f32.mrb[0].mxu0
  %v656 = vpop.f32.mrb[0].mxu0
  %v657 = vadd.f32 %v616, %v656
  %v658 = vpop.f32.mrb[0].mxu0
  %659 = vdwg.mxu0
  %660 = vmatprep.subr.bf16.mxu0 0
  %661 = vmatpush1.bf16.msra.mxu0 %v482
  %662 = vmatprep.subr.bf16.mxu0 0
  %663 = vmatpush1.bf16.msra.mxu0 %v483
  %664 = vmatprep.subr.bf16.mxu0 0
  %665 = vmatpush1.bf16.msra.mxu0 %v484
  %666 = vmatprep.subr.bf16.mxu0 0
  %667 = vmatpush1.bf16.msra.mxu0 %v485
  %668 = vmatprep.subr.bf16.mxu0 0
  %669 = vmatpush1.bf16.msra.mxu0 %v486
  %670 = vmatprep.subr.bf16.mxu0 0
  %671 = vmatpush1.bf16.msra.mxu0 %v487
  %672 = vmatprep.subr.bf16.mxu0 0
  %673 = vmatpush1.bf16.msra.mxu0 %v488
  %674 = vmatprep.subr.bf16.mxu0 0
  %675 = vmatpush1.bf16.msra.mxu0 %v489
  %676 = vmatprep.subr.bf16.mxu0 0
  %677 = vmatpush1.bf16.msra.mxu0 %v490
  %678 = vmatprep.subr.bf16.mxu0 0
  %679 = vmatpush1.bf16.msra.mxu0 %v491
  %680 = vmatprep.subr.bf16.mxu0 0
  %681 = vmatpush1.bf16.msra.mxu0 %v492
  %682 = vmatprep.subr.bf16.mxu0 0
  %683 = vmatpush1.bf16.msra.mxu0 %v493
  %684 = vmatprep.subr.bf16.mxu0 0
  %685 = vmatpush1.bf16.msra.mxu0 %v494
  %686 = vmatprep.subr.bf16.mxu0 0
  %687 = vmatpush1.bf16.msra.mxu0 %v495
  %688 = vmatprep.subr.bf16.mxu0 0
  %689 = vmatpush1.bf16.msra.mxu0 %v496
  %690 = vmatprep.subr.bf16.mxu0 0
  %691 = vmatpush1.bf16.msra.mxu0 %v497
  %692 = vmatprep.mubr.bf16.mxu0 %v63
  %693 = vmatmul.mubr.bf16.gmra.mrb[0].mxu0 %v62
  %v694 = vpop.f32.mrb[0].mxu0
  %v695 = vadd.f32 %v654, %v694
  %v696 = vpop.f32.mrb[0].mxu0
  %v697 = vpop.f32.mrb[0].mxu0
  %v698 = vadd.f32 %v657, %v697
  %v699 = vpop.f32.mrb[0].mxu0
  %700 = vdwg.mxu0
  %701 = vmatprep.subr.bf16.mxu0 0
  %702 = vmatpush1.bf16.msra.mxu0 %v498
  %703 = vmatprep.subr.bf16.mxu0 0
  %704 = vmatpush1.bf16.msra.mxu0 %v499
  %705 = vmatprep.subr.bf16.mxu0 0
  %706 = vmatpush1.bf16.msra.mxu0 %v500
  %707 = vmatprep.subr.bf16.mxu0 0
  %708 = vmatpush1.bf16.msra.mxu0 %v501
  %709 = vmatprep.subr.bf16.mxu0 0
  %710 = vmatpush1.bf16.msra.mxu0 %v502
  %711 = vmatprep.subr.bf16.mxu0 0
  %712 = vmatpush1.bf16.msra.mxu0 %v503
  %713 = vmatprep.subr.bf16.mxu0 0
  %714 = vmatpush1.bf16.msra.mxu0 %v504
  %715 = vmatprep.subr.bf16.mxu0 0
  %716 = vmatpush1.bf16.msra.mxu0 %v505
  %717 = vmatprep.subr.bf16.mxu0 0
  %718 = vmatpush1.bf16.msra.mxu0 %v506
  %719 = vmatprep.subr.bf16.mxu0 0
  %720 = vmatpush1.bf16.msra.mxu0 %v507
  %721 = vmatprep.subr.bf16.mxu0 0
  %722 = vmatpush1.bf16.msra.mxu0 %v508
  %723 = vmatprep.subr.bf16.mxu0 0
  %724 = vmatpush1.bf16.msra.mxu0 %v509
  %725 = vmatprep.subr.bf16.mxu0 0
  %726 = vmatpush1.bf16.msra.mxu0 %v510
  %727 = vmatprep.subr.bf16.mxu0 0
  %728 = vmatpush1.bf16.msra.mxu0 %v511
  %729 = vmatprep.subr.bf16.mxu0 0
  %730 = vmatpush1.bf16.msra.mxu0 %v512
  %731 = vmatprep.subr.bf16.mxu0 0
  %732 = vmatpush1.bf16.msra.mxu0 %v513
  %733 = vmatprep.mubr.bf16.mxu0 %v65
  %734 = vmatmul.mubr.bf16.gmra.mrb[0].mxu0 %v64
  %v735 = vpop.f32.mrb[0].mxu0
  %v736 = vadd.f32 %v695, %v735
  %v737 = vpop.f32.mrb[0].mxu0
  %v738 = vpop.f32.mrb[0].mxu0
  %v739 = vadd.f32 %v698, %v738
  %v740 = vpop.f32.mrb[0].mxu0
  %741 = vdwg.mxu0
  %v742 = vadd.f32 %v40, %v736
  %v743 = vadd.f32 %v41, %v739
  %744 = vst [vmem:[#allocation2] sm:$0xff] %v742
  %745 = vst [vmem:[#allocation2 + $0x8] sm:$0xff] %v743
  %v746 = vld [vmem:[#allocation3] sm:$0xff]
  %v747 = vld [vmem:[#allocation3 + $0x8] sm:$0xff]
  %v748 = vld [vmem:[%s1] sm:$0xff]
  %v749 = vld [vmem:[%s1 + $0x8] sm:$0xff]
  %v750 = vld [vmem:[%s1 + $0x10] sm:$0xff]
  %v751 = vld [vmem:[%s1 + $0x18] sm:$0xff]
  %v752 = vld [vmem:[%s1 + $0x20] sm:$0xff]
  %v753 = vld [vmem:[%s1 + $0x28] sm:$0xff]
  %v754 = vld [vmem:[%s1 + $0x30] sm:$0xff]
  %v755 = vld [vmem:[%s1 + $0x38] sm:$0xff]
  %v756 = vld [vmem:[%s1 + $0x40] sm:$0xff]
  %v757 = vld [vmem:[%s1 + $0x48] sm:$0xff]
  %v758 = vld [vmem:[%s1 + $0x50] sm:$0xff]
  %v759 = vld [vmem:[%s1 + $0x58] sm:$0xff]
  %v760 = vld [vmem:[%s1 + $0x60] sm:$0xff]
  %v761 = vld [vmem:[%s1 + $0x68] sm:$0xff]
  %v762 = vld [vmem:[%s1 + $0x70] sm:$0xff]
  %v763 = vld [vmem:[%s1 + $0x78] sm:$0xff]
  %v764 = vpack.c.bf16 %v756, %v748
  %v765 = vpack.c.bf16 %v757, %v749
  %v766 = vpack.c.bf16 %v758, %v750
  %v767 = vpack.c.bf16 %v759, %v751
  %v768 = vpack.c.bf16 %v760, %v752
  %v769 = vpack.c.bf16 %v761, %v753
  %v770 = vpack.c.bf16 %v762, %v754
  %v771 = vpack.c.bf16 %v763, %v755
  %v772 = vld [vmem:[%s3] sm:$0xf]
  %v773 = vld [vmem:[%s3 + $0x4] sm:$0xf]
  %v774 = vld [vmem:[%s3 + $0x8] sm:$0xf]
  %v775 = vld [vmem:[%s3 + $0xc] sm:$0xf]
  %v776 = vld [vmem:[%s3 + $0x10] sm:$0xf]
  %v777 = vld [vmem:[%s3 + $0x14] sm:$0xf]
  %v778 = vld [vmem:[%s3 + $0x18] sm:$0xf]
  %v779 = vld [vmem:[%s3 + $0x1c] sm:$0xf]
  %v780 = vld [vmem:[%s3 + $0x20] sm:$0xf]
  %v781 = vld [vmem:[%s3 + $0x24] sm:$0xf]
  %v782 = vld [vmem:[%s3 + $0x28] sm:$0xf]
  %v783 = vld [vmem:[%s3 + $0x2c] sm:$0xf]
  %v784 = vld [vmem:[%s3 + $0x30] sm:$0xf]
  %v785 = vld [vmem:[%s3 + $0x34] sm:$0xf]
  %v786 = vld [vmem:[%s3 + $0x38] sm:$0xf]
  %v787 = vld [vmem:[%s3 + $0x3c] sm:$0xf]
  %v788 = vld [vmem:[%s3 + $0x40] sm:$0xf]
  %v789 = vld [vmem:[%s3 + $0x44] sm:$0xf]
  %v790 = vld [vmem:[%s3 + $0x48] sm:$0xf]
  %v791 = vld [vmem:[%s3 + $0x4c] sm:$0xf]
  %v792 = vld [vmem:[%s3 + $0x50] sm:$0xf]
  %v793 = vld [vmem:[%s3 + $0x54] sm:$0xf]
  %v794 = vld [vmem:[%s3 + $0x58] sm:$0xf]
  %v795 = vld [vmem:[%s3 + $0x5c] sm:$0xf]
  %v796 = vld [vmem:[%s3 + $0x60] sm:$0xf]
  %v797 = vld [vmem:[%s3 + $0x64] sm:$0xf]
  %v798 = vld [vmem:[%s3 + $0x68] sm:$0xf]
  %v799 = vld [vmem:[%s3 + $0x6c] sm:$0xf]
  %v800 = vld [vmem:[%s3 + $0x70] sm:$0xf]
  %v801 = vld [vmem:[%s3 + $0x74] sm:$0xf]
  %v802 = vld [vmem:[%s3 + $0x78] sm:$0xf]
  %v803 = vld [vmem:[%s3 + $0x7c] sm:$0xf]
  %v804 = vld [vmem:[%s3 + $0x80] sm:$0xf]
  %v805 = vld [vmem:[%s3 + $0x84] sm:$0xf]
  %v806 = vld [vmem:[%s3 + $0x88] sm:$0xf]
  %v807 = vld [vmem:[%s3 + $0x8c] sm:$0xf]
  %v808 = vld [vmem:[%s3 + $0x90] sm:$0xf]
  %v809 = vld [vmem:[%s3 + $0x94] sm:$0xf]
  %v810 = vld [vmem:[%s3 + $0x98] sm:$0xf]
  %v811 = vld [vmem:[%s3 + $0x9c] sm:$0xf]
  %v812 = vld [vmem:[%s3 + $0xa0] sm:$0xf]
  %v813 = vld [vmem:[%s3 + $0xa4] sm:$0xf]
  %v814 = vld [vmem:[%s3 + $0xa8] sm:$0xf]
  %v815 = vld [vmem:[%s3 + $0xac] sm:$0xf]
  %v816 = vld [vmem:[%s3 + $0xb0] sm:$0xf]
  %v817 = vld [vmem:[%s3 + $0xb4] sm:$0xf]
  %v818 = vld [vmem:[%s3 + $0xb8] sm:$0xf]
  %v819 = vld [vmem:[%s3 + $0xbc] sm:$0xf]
  %v820 = vld [vmem:[%s3 + $0xc0] sm:$0xf]
  %v821 = vld [vmem:[%s3 + $0xc4] sm:$0xf]
  %v822 = vld [vmem:[%s3 + $0xc8] sm:$0xf]
  %v823 = vld [vmem:[%s3 + $0xcc] sm:$0xf]
  %v824 = vld [vmem:[%s3 + $0xd0] sm:$0xf]
  %v825 = vld [vmem:[%s3 + $0xd4] sm:$0xf]
  %v826 = vld [vmem:[%s3 + $0xd8] sm:$0xf]
  %v827 = vld [vmem:[%s3 + $0xdc] sm:$0xf]
  %v828 = vld [vmem:[%s3 + $0xe0] sm:$0xf]
  %v829 = vld [vmem:[%s3 + $0xe4] sm:$0xf]
  %v830 = vld [vmem:[%s3 + $0xe8] sm:$0xf]
  %v831 = vld [vmem:[%s3 + $0xec] sm:$0xf]
  %v832 = vld [vmem:[%s3 + $0xf0] sm:$0xf]
  %v833 = vld [vmem:[%s3 + $0xf4] sm:$0xf]
  %v834 = vld [vmem:[%s3 + $0xf8] sm:$0xf]
  %v835 = vld [vmem:[%s3 + $0xfc] sm:$0xf]
  %v836 = vld [vmem:[%s3 + $0x100] sm:$0xf]
  %v837 = vld [vmem:[%s3 + $0x104] sm:$0xf]
  %v838 = vld [vmem:[%s3 + $0x108] sm:$0xf]
  %v839 = vld [vmem:[%s3 + $0x10c] sm:$0xf]
  %v840 = vld [vmem:[%s3 + $0x110] sm:$0xf]
  %v841 = vld [vmem:[%s3 + $0x114] sm:$0xf]
  %v842 = vld [vmem:[%s3 + $0x118] sm:$0xf]
  %v843 = vld [vmem:[%s3 + $0x11c] sm:$0xf]
  %v844 = vld [vmem:[%s3 + $0x120] sm:$0xf]
  %v845 = vld [vmem:[%s3 + $0x124] sm:$0xf]
  %v846 = vld [vmem:[%s3 + $0x128] sm:$0xf]
  %v847 = vld [vmem:[%s3 + $0x12c] sm:$0xf]
  %v848 = vld [vmem:[%s3 + $0x130] sm:$0xf]
  %v849 = vld [vmem:[%s3 + $0x134] sm:$0xf]
  %v850 = vld [vmem:[%s3 + $0x138] sm:$0xf]
  %v851 = vld [vmem:[%s3 + $0x13c] sm:$0xf]
  %v852 = vld [vmem:[%s3 + $0x140] sm:$0xf]
  %v853 = vld [vmem:[%s3 + $0x144] sm:$0xf]
  %v854 = vld [vmem:[%s3 + $0x148] sm:$0xf]
  %v855 = vld [vmem:[%s3 + $0x14c] sm:$0xf]
  %v856 = vld [vmem:[%s3 + $0x150] sm:$0xf]
  %v857 = vld [vmem:[%s3 + $0x154] sm:$0xf]
  %v858 = vld [vmem:[%s3 + $0x158] sm:$0xf]
  %v859 = vld [vmem:[%s3 + $0x15c] sm:$0xf]
  %v860 = vld [vmem:[%s3 + $0x160] sm:$0xf]
  %v861 = vld [vmem:[%s3 + $0x164] sm:$0xf]
  %v862 = vld [vmem:[%s3 + $0x168] sm:$0xf]
  %v863 = vld [vmem:[%s3 + $0x16c] sm:$0xf]
  %v864 = vld [vmem:[%s3 + $0x170] sm:$0xf]
  %v865 = vld [vmem:[%s3 + $0x174] sm:$0xf]
  %v866 = vld [vmem:[%s3 + $0x178] sm:$0xf]
  %v867 = vld [vmem:[%s3 + $0x17c] sm:$0xf]
  %v868 = vld [vmem:[%s3 + $0x180] sm:$0xf]
  %v869 = vld [vmem:[%s3 + $0x184] sm:$0xf]
  %v870 = vld [vmem:[%s3 + $0x188] sm:$0xf]
  %v871 = vld [vmem:[%s3 + $0x18c] sm:$0xf]
  %v872 = vld [vmem:[%s3 + $0x190] sm:$0xf]
  %v873 = vld [vmem:[%s3 + $0x194] sm:$0xf]
  %v874 = vld [vmem:[%s3 + $0x198] sm:$0xf]
  %v875 = vld [vmem:[%s3 + $0x19c] sm:$0xf]
  %v876 = vld [vmem:[%s3 + $0x1a0] sm:$0xf]
  %v877 = vld [vmem:[%s3 + $0x1a4] sm:$0xf]
  %v878 = vld [vmem:[%s3 + $0x1a8] sm:$0xf]
  %v879 = vld [vmem:[%s3 + $0x1ac] sm:$0xf]
  %v880 = vld [vmem:[%s3 + $0x1b0] sm:$0xf]
  %v881 = vld [vmem:[%s3 + $0x1b4] sm:$0xf]
  %v882 = vld [vmem:[%s3 + $0x1b8] sm:$0xf]
  %v883 = vld [vmem:[%s3 + $0x1bc] sm:$0xf]
  %v884 = vld [vmem:[%s3 + $0x1c0] sm:$0xf]
  %v885 = vld [vmem:[%s3 + $0x1c4] sm:$0xf]
  %v886 = vld [vmem:[%s3 + $0x1c8] sm:$0xf]
  %v887 = vld [vmem:[%s3 + $0x1cc] sm:$0xf]
  %v888 = vld [vmem:[%s3 + $0x1d0] sm:$0xf]
  %v889 = vld [vmem:[%s3 + $0x1d4] sm:$0xf]
  %v890 = vld [vmem:[%s3 + $0x1d8] sm:$0xf]
  %v891 = vld [vmem:[%s3 + $0x1dc] sm:$0xf]
  %v892 = vld [vmem:[%s3 + $0x1e0] sm:$0xf]
  %v893 = vld [vmem:[%s3 + $0x1e4] sm:$0xf]
  %v894 = vld [vmem:[%s3 + $0x1e8] sm:$0xf]
  %v895 = vld [vmem:[%s3 + $0x1ec] sm:$0xf]
  %v896 = vld [vmem:[%s3 + $0x1f0] sm:$0xf]
  %v897 = vld [vmem:[%s3 + $0x1f4] sm:$0xf]
  %v898 = vld [vmem:[%s3 + $0x1f8] sm:$0xf]
  %v899 = vld [vmem:[%s3 + $0x1fc] sm:$0xf]
  %v1028 = vunpack.c.l.b16 %v772
  %v1029 = vunpack.c.l.b16 %v773
  %v1030 = vunpack.c.l.b16 %v774
  %v1031 = vunpack.c.l.b16 %v775
  %v1032 = vunpack.c.l.b16 %v776
  %v1033 = vunpack.c.l.b16 %v777
  %v1034 = vunpack.c.l.b16 %v778
  %v1035 = vunpack.c.l.b16 %v779
  %v1036 = vunpack.c.l.b16 %v780
  %v1037 = vunpack.c.l.b16 %v781
  %v1038 = vunpack.c.l.b16 %v782
  %v1039 = vunpack.c.l.b16 %v783
  %v1040 = vunpack.c.l.b16 %v784
  %v1041 = vunpack.c.l.b16 %v785
  %v1042 = vunpack.c.l.b16 %v786
  %v1043 = vunpack.c.l.b16 %v787
  %v1044 = vunpack.c.l.b16 %v788
  %v1045 = vunpack.c.l.b16 %v789
  %v1046 = vunpack.c.l.b16 %v790
  %v1047 = vunpack.c.l.b16 %v791
  %v1048 = vunpack.c.l.b16 %v792
  %v1049 = vunpack.c.l.b16 %v793
  %v1050 = vunpack.c.l.b16 %v794
  %v1051 = vunpack.c.l.b16 %v795
  %v1052 = vunpack.c.l.b16 %v796
  %v1053 = vunpack.c.l.b16 %v797
  %v1054 = vunpack.c.l.b16 %v798
  %v1055 = vunpack.c.l.b16 %v799
  %v1056 = vunpack.c.l.b16 %v800
  %v1057 = vunpack.c.l.b16 %v801
  %v1058 = vunpack.c.l.b16 %v802
  %v1059 = vunpack.c.l.b16 %v803
  %v1060 = vunpack.c.l.b16 %v804
  %v1061 = vunpack.c.l.b16 %v805
  %v1062 = vunpack.c.l.b16 %v806
  %v1063 = vunpack.c.l.b16 %v807
  %v1064 = vunpack.c.l.b16 %v808
  %v1065 = vunpack.c.l.b16 %v809
  %v1066 = vunpack.c.l.b16 %v810
  %v1067 = vunpack.c.l.b16 %v811
  %v1068 = vunpack.c.l.b16 %v812
  %v1069 = vunpack.c.l.b16 %v813
  %v1070 = vunpack.c.l.b16 %v814
  %v1071 = vunpack.c.l.b16 %v815
  %v1072 = vunpack.c.l.b16 %v816
  %v1073 = vunpack.c.l.b16 %v817
  %v1074 = vunpack.c.l.b16 %v818
  %v1075 = vunpack.c.l.b16 %v819
  %v1076 = vunpack.c.l.b16 %v820
  %v1077 = vunpack.c.l.b16 %v821
  %v1078 = vunpack.c.l.b16 %v822
  %v1079 = vunpack.c.l.b16 %v823
  %v1080 = vunpack.c.l.b16 %v824
  %v1081 = vunpack.c.l.b16 %v825
  %v1082 = vunpack.c.l.b16 %v826
  %v1083 = vunpack.c.l.b16 %v827
  %v1084 = vunpack.c.l.b16 %v828
  %v1085 = vunpack.c.l.b16 %v829
  %v1086 = vunpack.c.l.b16 %v830
  %v1087 = vunpack.c.l.b16 %v831
  %v1088 = vunpack.c.l.b16 %v832
  %v1089 = vunpack.c.l.b16 %v833
  %v1090 = vunpack.c.l.b16 %v834
  %v1091 = vunpack.c.l.b16 %v835
  %v1092 = vunpack.c.l.b16 %v836
  %v1093 = vunpack.c.l.b16 %v837
  %v1094 = vunpack.c.l.b16 %v838
  %v1095 = vunpack.c.l.b16 %v839
  %v1096 = vunpack.c.l.b16 %v840
  %v1097 = vunpack.c.l.b16 %v841
  %v1098 = vunpack.c.l.b16 %v842
  %v1099 = vunpack.c.l.b16 %v843
  %v1100 = vunpack.c.l.b16 %v844
  %v1101 = vunpack.c.l.b16 %v845
  %v1102 = vunpack.c.l.b16 %v846
  %v1103 = vunpack.c.l.b16 %v847
  %v1104 = vunpack.c.l.b16 %v848
  %v1105 = vunpack.c.l.b16 %v849
  %v1106 = vunpack.c.l.b16 %v850
  %v1107 = vunpack.c.l.b16 %v851
  %v1108 = vunpack.c.l.b16 %v852
  %v1109 = vunpack.c.l.b16 %v853
  %v1110 = vunpack.c.l.b16 %v854
  %v1111 = vunpack.c.l.b16 %v855
  %v1112 = vunpack.c.l.b16 %v856
  %v1113 = vunpack.c.l.b16 %v857
  %v1114 = vunpack.c.l.b16 %v858
  %v1115 = vunpack.c.l.b16 %v859
  %v1116 = vunpack.c.l.b16 %v860
  %v1117 = vunpack.c.l.b16 %v861
  %v1118 = vunpack.c.l.b16 %v862
  %v1119 = vunpack.c.l.b16 %v863
  %v1120 = vunpack.c.l.b16 %v864
  %v1121 = vunpack.c.l.b16 %v865
  %v1122 = vunpack.c.l.b16 %v866
  %v1123 = vunpack.c.l.b16 %v867
  %v1124 = vunpack.c.l.b16 %v868
  %v1125 = vunpack.c.l.b16 %v869
  %v1126 = vunpack.c.l.b16 %v870
  %v1127 = vunpack.c.l.b16 %v871
  %v1128 = vunpack.c.l.b16 %v872
  %v1129 = vunpack.c.l.b16 %v873
  %v1130 = vunpack.c.l.b16 %v874
  %v1131 = vunpack.c.l.b16 %v875
  %v1132 = vunpack.c.l.b16 %v876
  %v1133 = vunpack.c.l.b16 %v877
  %v1134 = vunpack.c.l.b16 %v878
  %v1135 = vunpack.c.l.b16 %v879
  %v1136 = vunpack.c.l.b16 %v880
  %v1137 = vunpack.c.l.b16 %v881
  %v1138 = vunpack.c.l.b16 %v882
  %v1139 = vunpack.c.l.b16 %v883
  %v1140 = vunpack.c.l.b16 %v884
  %v1141 = vunpack.c.l.b16 %v885
  %v1142 = vunpack.c.l.b16 %v886
  %v1143 = vunpack.c.l.b16 %v887
  %v1144 = vunpack.c.l.b16 %v888
  %v1145 = vunpack.c.l.b16 %v889
  %v1146 = vunpack.c.l.b16 %v890
  %v1147 = vunpack.c.l.b16 %v891
  %v1148 = vunpack.c.l.b16 %v892
  %v1149 = vunpack.c.l.b16 %v893
  %v1150 = vunpack.c.l.b16 %v894
  %v1151 = vunpack.c.l.b16 %v895
  %v1152 = vunpack.c.l.b16 %v896
  %v1153 = vunpack.c.l.b16 %v897
  %v1154 = vunpack.c.l.b16 %v898
  %v1155 = vunpack.c.l.b16 %v899
  %v1156 = vpack.c.b16 %v1029, %v1028
  %v1157 = vpack.c.b16 %v1031, %v1030
  %v1158 = vpack.c.b16 %v1033, %v1032
  %v1159 = vpack.c.b16 %v1035, %v1034
  %v1160 = vpack.c.b16 %v1037, %v1036
  %v1161 = vpack.c.b16 %v1039, %v1038
  %v1162 = vpack.c.b16 %v1041, %v1040
  %v1163 = vpack.c.b16 %v1043, %v1042
  %v1164 = vpack.c.b16 %v1045, %v1044
  %v1165 = vpack.c.b16 %v1047, %v1046
  %v1166 = vpack.c.b16 %v1049, %v1048
  %v1167 = vpack.c.b16 %v1051, %v1050
  %v1168 = vpack.c.b16 %v1053, %v1052
  %v1169 = vpack.c.b16 %v1055, %v1054
  %v1170 = vpack.c.b16 %v1057, %v1056
  %v1171 = vpack.c.b16 %v1059, %v1058
  %v1172 = vpack.c.b16 %v1061, %v1060
  %v1173 = vpack.c.b16 %v1063, %v1062
  %v1174 = vpack.c.b16 %v1065, %v1064
  %v1175 = vpack.c.b16 %v1067, %v1066
  %v1176 = vpack.c.b16 %v1069, %v1068
  %v1177 = vpack.c.b16 %v1071, %v1070
  %v1178 = vpack.c.b16 %v1073, %v1072
  %v1179 = vpack.c.b16 %v1075, %v1074
  %v1180 = vpack.c.b16 %v1077, %v1076
  %v1181 = vpack.c.b16 %v1079, %v1078
  %v1182 = vpack.c.b16 %v1081, %v1080
  %v1183 = vpack.c.b16 %v1083, %v1082
  %v1184 = vpack.c.b16 %v1085, %v1084
  %v1185 = vpack.c.b16 %v1087, %v1086
  %v1186 = vpack.c.b16 %v1089, %v1088
  %v1187 = vpack.c.b16 %v1091, %v1090
  %v1188 = vpack.c.b16 %v1093, %v1092
  %v1189 = vpack.c.b16 %v1095, %v1094
  %v1190 = vpack.c.b16 %v1097, %v1096
  %v1191 = vpack.c.b16 %v1099, %v1098
  %v1192 = vpack.c.b16 %v1101, %v1100
  %v1193 = vpack.c.b16 %v1103, %v1102
  %v1194 = vpack.c.b16 %v1105, %v1104
  %v1195 = vpack.c.b16 %v1107, %v1106
  %v1196 = vpack.c.b16 %v1109, %v1108
  %v1197 = vpack.c.b16 %v1111, %v1110
  %v1198 = vpack.c.b16 %v1113, %v1112
  %v1199 = vpack.c.b16 %v1115, %v1114
  %v1200 = vpack.c.b16 %v1117, %v1116
  %v1201 = vpack.c.b16 %v1119, %v1118
  %v1202 = vpack.c.b16 %v1121, %v1120
  %v1203 = vpack.c.b16 %v1123, %v1122
  %v1204 = vpack.c.b16 %v1125, %v1124
  %v1205 = vpack.c.b16 %v1127, %v1126
  %v1206 = vpack.c.b16 %v1129, %v1128
  %v1207 = vpack.c.b16 %v1131, %v1130
  %v1208 = vpack.c.b16 %v1133, %v1132
  %v1209 = vpack.c.b16 %v1135, %v1134
  %v1210 = vpack.c.b16 %v1137, %v1136
  %v1211 = vpack.c.b16 %v1139, %v1138
  %v1212 = vpack.c.b16 %v1141, %v1140
  %v1213 = vpack.c.b16 %v1143, %v1142
  %v1214 = vpack.c.b16 %v1145, %v1144
  %v1215 = vpack.c.b16 %v1147, %v1146
  %v1216 = vpack.c.b16 %v1149, %v1148
  %v1217 = vpack.c.b16 %v1151, %v1150
  %v1218 = vpack.c.b16 %v1153, %v1152
  %v1219 = vpack.c.b16 %v1155, %v1154
  %1284 = vmatprep.subr.bf16.mxu0 0
  %1285 = vmatpush1.bf16.msra.mxu0 %v1156
  %1286 = vmatprep.subr.bf16.mxu0 0
  %1287 = vmatpush1.bf16.msra.mxu0 %v1157
  %1288 = vmatprep.subr.bf16.mxu0 0
  %1289 = vmatpush1.bf16.msra.mxu0 %v1158
  %1290 = vmatprep.subr.bf16.mxu0 0
  %1291 = vmatpush1.bf16.msra.mxu0 %v1159
  %1292 = vmatprep.subr.bf16.mxu0 0
  %1293 = vmatpush1.bf16.msra.mxu0 %v1160
  %1294 = vmatprep.subr.bf16.mxu0 0
  %1295 = vmatpush1.bf16.msra.mxu0 %v1161
  %1296 = vmatprep.subr.bf16.mxu0 0
  %1297 = vmatpush1.bf16.msra.mxu0 %v1162
  %1298 = vmatprep.subr.bf16.mxu0 0
  %1299 = vmatpush1.bf16.msra.mxu0 %v1163
  %1300 = vmatprep.subr.bf16.mxu0 0
  %1301 = vmatpush1.bf16.msra.mxu0 %v1164
  %1302 = vmatprep.subr.bf16.mxu0 0
  %1303 = vmatpush1.bf16.msra.mxu0 %v1165
  %1304 = vmatprep.subr.bf16.mxu0 0
  %1305 = vmatpush1.bf16.msra.mxu0 %v1166
  %1306 = vmatprep.subr.bf16.mxu0 0
  %1307 = vmatpush1.bf16.msra.mxu0 %v1167
  %1308 = vmatprep.subr.bf16.mxu0 0
  %1309 = vmatpush1.bf16.msra.mxu0 %v1168
  %1310 = vmatprep.subr.bf16.mxu0 0
  %1311 = vmatpush1.bf16.msra.mxu0 %v1169
  %1312 = vmatprep.subr.bf16.mxu0 0
  %1313 = vmatpush1.bf16.msra.mxu0 %v1170
  %1314 = vmatprep.subr.bf16.mxu0 0
  %1315 = vmatpush1.bf16.msra.mxu0 %v1171
  %1316 = vmatprep.mubr.bf16.mxu0 %v765
  %1317 = vmatmul.mubr.bf16.gmra.mrb[0].mxu0 %v764
  %v1318 = vpop.f32.mrb[0].mxu0
  %v1319 = vadd.f32 0.0, %v1318
  %v1320 = vpop.f32.mrb[0].mxu0
  %v1321 = vpop.f32.mrb[0].mxu0
  %v1322 = vadd.f32 0.0, %v1321
  %v1323 = vpop.f32.mrb[0].mxu0
  %1324 = vdwg.mxu0
  %1325 = vmatprep.subr.bf16.mxu0 0
  %1326 = vmatpush1.bf16.msra.mxu0 %v1172
  %1327 = vmatprep.subr.bf16.mxu0 0
  %1328 = vmatpush1.bf16.msra.mxu0 %v1173
  %1329 = vmatprep.subr.bf16.mxu0 0
  %1330 = vmatpush1.bf16.msra.mxu0 %v1174
  %1331 = vmatprep.subr.bf16.mxu0 0
  %1332 = vmatpush1.bf16.msra.mxu0 %v1175
  %1333 = vmatprep.subr.bf16.mxu0 0
  %1334 = vmatpush1.bf16.msra.mxu0 %v1176
  %1335 = vmatprep.subr.bf16.mxu0 0
  %1336 = vmatpush1.bf16.msra.mxu0 %v1177
  %1337 = vmatprep.subr.bf16.mxu0 0
  %1338 = vmatpush1.bf16.msra.mxu0 %v1178
  %1339 = vmatprep.subr.bf16.mxu0 0
  %1340 = vmatpush1.bf16.msra.mxu0 %v1179
  %1341 = vmatprep.subr.bf16.mxu0 0
  %1342 = vmatpush1.bf16.msra.mxu0 %v1180
  %1343 = vmatprep.subr.bf16.mxu0 0
  %1344 = vmatpush1.bf16.msra.mxu0 %v1181
  %1345 = vmatprep.subr.bf16.mxu0 0
  %1346 = vmatpush1.bf16.msra.mxu0 %v1182
  %1347 = vmatprep.subr.bf16.mxu0 0
  %1348 = vmatpush1.bf16.msra.mxu0 %v1183
  %1349 = vmatprep.subr.bf16.mxu0 0
  %1350 = vmatpush1.bf16.msra.mxu0 %v1184
  %1351 = vmatprep.subr.bf16.mxu0 0
  %1352 = vmatpush1.bf16.msra.mxu0 %v1185
  %1353 = vmatprep.subr.bf16.mxu0 0
  %1354 = vmatpush1.bf16.msra.mxu0 %v1186
  %1355 = vmatprep.subr.bf16.mxu0 0
  %1356 = vmatpush1.bf16.msra.mxu0 %v1187
  %1357 = vmatprep.mubr.bf16.mxu0 %v767
  %1358 = vmatmul.mubr.bf16.gmra.mrb[0].mxu0 %v766
  %v1359 = vpop.f32.mrb[0].mxu0
  %v1360 = vadd.f32 %v1319, %v1359
  %v1361 = vpop.f32.mrb[0].mxu0
  %v1362 = vpop.f32.mrb[0].mxu0
  %v1363 = vadd.f32 %v1322, %v1362
  %v1364 = vpop.f32.mrb[0].mxu0
  %1365 = vdwg.mxu0
  %1366 = vmatprep.subr.bf16.mxu0 0
  %1367 = vmatpush1.bf16.msra.mxu0 %v1188
  %1368 = vmatprep.subr.bf16.mxu0 0
  %1369 = vmatpush1.bf16.msra.mxu0 %v1189
  %1370 = vmatprep.subr.bf16.mxu0 0
  %1371 = vmatpush1.bf16.msra.mxu0 %v1190
  %1372 = vmatprep.subr.bf16.mxu0 0
  %1373 = vmatpush1.bf16.msra.mxu0 %v1191
  %1374 = vmatprep.subr.bf16.mxu0 0
  %1375 = vmatpush1.bf16.msra.mxu0 %v1192
  %1376 = vmatprep.subr.bf16.mxu0 0
  %1377 = vmatpush1.bf16.msra.mxu0 %v1193
  %1378 = vmatprep.subr.bf16.mxu0 0
  %1379 = vmatpush1.bf16.msra.mxu0 %v1194
  %1380 = vmatprep.subr.bf16.mxu0 0
  %1381 = vmatpush1.bf16.msra.mxu0 %v1195
  %1382 = vmatprep.subr.bf16.mxu0 0
  %1383 = vmatpush1.bf16.msra.mxu0 %v1196
  %1384 = vmatprep.subr.bf16.mxu0 0
  %1385 = vmatpush1.bf16.msra.mxu0 %v1197
  %1386 = vmatprep.subr.bf16.mxu0 0
  %1387 = vmatpush1.bf16.msra.mxu0 %v1198
  %1388 = vmatprep.subr.bf16.mxu0 0
  %1389 = vmatpush1.bf16.msra.mxu0 %v1199
  %1390 = vmatprep.subr.bf16.mxu0 0
  %1391 = vmatpush1.bf16.msra.mxu0 %v1200
  %1392 = vmatprep.subr.bf16.mxu0 0
  %1393 = vmatpush1.bf16.msra.mxu0 %v1201
  %1394 = vmatprep.subr.bf16.mxu0 0
  %1395 = vmatpush1.bf16.msra.mxu0 %v1202
  %1396 = vmatprep.subr.bf16.mxu0 0
  %1397 = vmatpush1.bf16.msra.mxu0 %v1203
  %1398 = vmatprep.mubr.bf16.mxu0 %v769
  %1399 = vmatmul.mubr.bf16.gmra.mrb[0].mxu0 %v768
  %v1400 = vpop.f32.mrb[0].mxu0
  %v1401 = vadd.f32 %v1360, %v1400
  %v1402 = vpop.f32.mrb[0].mxu0
  %v1403 = vpop.f32.mrb[0].mxu0
  %v1404 = vadd.f32 %v1363, %v1403
  %v1405 = vpop.f32.mrb[0].mxu0
  %1406 = vdwg.mxu0
  %1407 = vmatprep.subr.bf16.mxu0 0
  %1408 = vmatpush1.bf16.msra.mxu0 %v1204
  %1409 = vmatprep.subr.bf16.mxu0 0
  %1410 = vmatpush1.bf16.msra.mxu0 %v1205
  %1411 = vmatprep.subr.bf16.mxu0 0
  %1412 = vmatpush1.bf16.msra.mxu0 %v1206
  %1413 = vmatprep.subr.bf16.mxu0 0
  %1414 = vmatpush1.bf16.msra.mxu0 %v1207
  %1415 = vmatprep.subr.bf16.mxu0 0
  %1416 = vmatpush1.bf16.msra.mxu0 %v1208
  %1417 = vmatprep.subr.bf16.mxu0 0
  %1418 = vmatpush1.bf16.msra.mxu0 %v1209
  %1419 = vmatprep.subr.bf16.mxu0 0
  %1420 = vmatpush1.bf16.msra.mxu0 %v1210
  %1421 = vmatprep.subr.bf16.mxu0 0
  %1422 = vmatpush1.bf16.msra.mxu0 %v1211
  %1423 = vmatprep.subr.bf16.mxu0 0
  %1424 = vmatpush1.bf16.msra.mxu0 %v1212
  %1425 = vmatprep.subr.bf16.mxu0 0
  %1426 = vmatpush1.bf16.msra.mxu0 %v1213
  %1427 = vmatprep.subr.bf16.mxu0 0
  %1428 = vmatpush1.bf16.msra.mxu0 %v1214
  %1429 = vmatprep.subr.bf16.mxu0 0
  %1430 = vmatpush1.bf16.msra.mxu0 %v1215
  %1431 = vmatprep.subr.bf16.mxu0 0
  %1432 = vmatpush1.bf16.msra.mxu0 %v1216
  %1433 = vmatprep.subr.bf16.mxu0 0
  %1434 = vmatpush1.bf16.msra.mxu0 %v1217
  %1435 = vmatprep.subr.bf16.mxu0 0
  %1436 = vmatpush1.bf16.msra.mxu0 %v1218
  %1437 = vmatprep.subr.bf16.mxu0 0
  %1438 = vmatpush1.bf16.msra.mxu0 %v1219
  %1439 = vmatprep.mubr.bf16.mxu0 %v771
  %1440 = vmatmul.mubr.bf16.gmra.mrb[0].mxu0 %v770
  %v1441 = vpop.f32.mrb[0].mxu0
  %v1442 = vadd.f32 %v1401, %v1441
  %v1443 = vpop.f32.mrb[0].mxu0
  %v1444 = vpop.f32.mrb[0].mxu0
  %v1445 = vadd.f32 %v1404, %v1444
  %v1446 = vpop.f32.mrb[0].mxu0
  %1447 = vdwg.mxu0
  %v1448 = vadd.f32 %v746, %v1442
  %v1449 = vadd.f32 %v747, %v1445
  %1450 = vst [vmem:[#allocation3] sm:$0xff] %v1448
  %1451 = vst [vmem:[#allocation3 + $0x8] sm:$0xff] %v1449
  %v1452 = vld [vmem:[#allocation4] sm:$0xff]
  %v1453 = vld [vmem:[#allocation4 + $0x8] sm:$0xff]
  %v1454 = vld [vmem:[%s2] sm:$0xff]
  %v1455 = vld [vmem:[%s2 + $0x8] sm:$0xff]
  %v1456 = vld [vmem:[%s2 + $0x10] sm:$0xff]
  %v1457 = vld [vmem:[%s2 + $0x18] sm:$0xff]
  %v1458 = vld [vmem:[%s2 + $0x20] sm:$0xff]
  %v1459 = vld [vmem:[%s2 + $0x28] sm:$0xff]
  %v1460 = vld [vmem:[%s2 + $0x30] sm:$0xff]
  %v1461 = vld [vmem:[%s2 + $0x38] sm:$0xff]
  %v1462 = vld [vmem:[%s2 + $0x40] sm:$0xff]
  %v1463 = vld [vmem:[%s2 + $0x48] sm:$0xff]
  %v1464 = vld [vmem:[%s2 + $0x50] sm:$0xff]
  %v1465 = vld [vmem:[%s2 + $0x58] sm:$0xff]
  %v1466 = vld [vmem:[%s2 + $0x60] sm:$0xff]
  %v1467 = vld [vmem:[%s2 + $0x68] sm:$0xff]
  %v1468 = vld [vmem:[%s2 + $0x70] sm:$0xff]
  %v1469 = vld [vmem:[%s2 + $0x78] sm:$0xff]
  %v1470 = vpack.c.bf16 %v1462, %v1454
  %v1471 = vpack.c.bf16 %v1463, %v1455
  %v1472 = vpack.c.bf16 %v1464, %v1456
  %v1473 = vpack.c.bf16 %v1465, %v1457
  %v1474 = vpack.c.bf16 %v1466, %v1458
  %v1475 = vpack.c.bf16 %v1467, %v1459
  %v1476 = vpack.c.bf16 %v1468, %v1460
  %v1477 = vpack.c.bf16 %v1469, %v1461
  %v1478 = vld [vmem:[%s3] sm:$0xf]
  %v1479 = vld [vmem:[%s3 + $0x4] sm:$0xf]
  %v1480 = vld [vmem:[%s3 + $0x8] sm:$0xf]
  %v1481 = vld [vmem:[%s3 + $0xc] sm:$0xf]
  %v1482 = vld [vmem:[%s3 + $0x10] sm:$0xf]
  %v1483 = vld [vmem:[%s3 + $0x14] sm:$0xf]
  %v1484 = vld [vmem:[%s3 + $0x18] sm:$0xf]
  %v1485 = vld [vmem:[%s3 + $0x1c] sm:$0xf]
  %v1486 = vld [vmem:[%s3 + $0x20] sm:$0xf]
  %v1487 = vld [vmem:[%s3 + $0x24] sm:$0xf]
  %v1488 = vld [vmem:[%s3 + $0x28] sm:$0xf]
  %v1489 = vld [vmem:[%s3 + $0x2c] sm:$0xf]
  %v1490 = vld [vmem:[%s3 + $0x30] sm:$0xf]
  %v1491 = vld [vmem:[%s3 + $0x34] sm:$0xf]
  %v1492 = vld [vmem:[%s3 + $0x38] sm:$0xf]
  %v1493 = vld [vmem:[%s3 + $0x3c] sm:$0xf]
  %v1494 = vld [vmem:[%s3 + $0x40] sm:$0xf]
  %v1495 = vld [vmem:[%s3 + $0x44] sm:$0xf]
  %v1496 = vld [vmem:[%s3 + $0x48] sm:$0xf]
  %v1497 = vld [vmem:[%s3 + $0x4c] sm:$0xf]
  %v1498 = vld [vmem:[%s3 + $0x50] sm:$0xf]
  %v1499 = vld [vmem:[%s3 + $0x54] sm:$0xf]
  %v1500 = vld [vmem:[%s3 + $0x58] sm:$0xf]
  %v1501 = vld [vmem:[%s3 + $0x5c] sm:$0xf]
  %v1502 = vld [vmem:[%s3 + $0x60] sm:$0xf]
  %v1503 = vld [vmem:[%s3 + $0x64] sm:$0xf]
  %v1504 = vld [vmem:[%s3 + $0x68] sm:$0xf]
  %v1505 = vld [vmem:[%s3 + $0x6c] sm:$0xf]
  %v1506 = vld [vmem:[%s3 + $0x70] sm:$0xf]
  %v1507 = vld [vmem:[%s3 + $0x74] sm:$0xf]
  %v1508 = vld [vmem:[%s3 + $0x78] sm:$0xf]
  %v1509 = vld [vmem:[%s3 + $0x7c] sm:$0xf]
  %v1510 = vld [vmem:[%s3 + $0x80] sm:$0xf]
  %v1511 = vld [vmem:[%s3 + $0x84] sm:$0xf]
  %v1512 = vld [vmem:[%s3 + $0x88] sm:$0xf]
  %v1513 = vld [vmem:[%s3 + $0x8c] sm:$0xf]
  %v1514 = vld [vmem:[%s3 + $0x90] sm:$0xf]
  %v1515 = vld [vmem:[%s3 + $0x94] sm:$0xf]
  %v1516 = vld [vmem:[%s3 + $0x98] sm:$0xf]
  %v1517 = vld [vmem:[%s3 + $0x9c] sm:$0xf]
  %v1518 = vld [vmem:[%s3 + $0xa0] sm:$0xf]
  %v1519 = vld [vmem:[%s3 + $0xa4] sm:$0xf]
  %v1520 = vld [vmem:[%s3 + $0xa8] sm:$0xf]
  %v1521 = vld [vmem:[%s3 + $0xac] sm:$0xf]
  %v1522 = vld [vmem:[%s3 + $0xb0] sm:$0xf]
  %v1523 = vld [vmem:[%s3 + $0xb4] sm:$0xf]
  %v1524 = vld [vmem:[%s3 + $0xb8] sm:$0xf]
  %v1525 = vld [vmem:[%s3 + $0xbc] sm:$0xf]
  %v1526 = vld [vmem:[%s3 + $0xc0] sm:$0xf]
  %v1527 = vld [vmem:[%s3 + $0xc4] sm:$0xf]
  %v1528 = vld [vmem:[%s3 + $0xc8] sm:$0xf]
  %v1529 = vld [vmem:[%s3 + $0xcc] sm:$0xf]
  %v1530 = vld [vmem:[%s3 + $0xd0] sm:$0xf]
  %v1531 = vld [vmem:[%s3 + $0xd4] sm:$0xf]
  %v1532 = vld [vmem:[%s3 + $0xd8] sm:$0xf]
  %v1533 = vld [vmem:[%s3 + $0xdc] sm:$0xf]
  %v1534 = vld [vmem:[%s3 + $0xe0] sm:$0xf]
  %v1535 = vld [vmem:[%s3 + $0xe4] sm:$0xf]
  %v1536 = vld [vmem:[%s3 + $0xe8] sm:$0xf]
  %v1537 = vld [vmem:[%s3 + $0xec] sm:$0xf]
  %v1538 = vld [vmem:[%s3 + $0xf0] sm:$0xf]
  %v1539 = vld [vmem:[%s3 + $0xf4] sm:$0xf]
  %v1540 = vld [vmem:[%s3 + $0xf8] sm:$0xf]
  %v1541 = vld [vmem:[%s3 + $0xfc] sm:$0xf]
  %v1542 = vld [vmem:[%s3 + $0x100] sm:$0xf]
  %v1543 = vld [vmem:[%s3 + $0x104] sm:$0xf]
  %v1544 = vld [vmem:[%s3 + $0x108] sm:$0xf]
  %v1545 = vld [vmem:[%s3 + $0x10c] sm:$0xf]
  %v1546 = vld [vmem:[%s3 + $0x110] sm:$0xf]
  %v1547 = vld [vmem:[%s3 + $0x114] sm:$0xf]
  %v1548 = vld [vmem:[%s3 + $0x118] sm:$0xf]
  %v1549 = vld [vmem:[%s3 + $0x11c] sm:$0xf]
  %v1550 = vld [vmem:[%s3 + $0x120] sm:$0xf]
  %v1551 = vld [vmem:[%s3 + $0x124] sm:$0xf]
  %v1552 = vld [vmem:[%s3 + $0x128] sm:$0xf]
  %v1553 = vld [vmem:[%s3 + $0x12c] sm:$0xf]
  %v1554 = vld [vmem:[%s3 + $0x130] sm:$0xf]
  %v1555 = vld [vmem:[%s3 + $0x134] sm:$0xf]
  %v1556 = vld [vmem:[%s3 + $0x138] sm:$0xf]
  %v1557 = vld [vmem:[%s3 + $0x13c] sm:$0xf]
  %v1558 = vld [vmem:[%s3 + $0x140] sm:$0xf]
  %v1559 = vld [vmem:[%s3 + $0x144] sm:$0xf]
  %v1560 = vld [vmem:[%s3 + $0x148] sm:$0xf]
  %v1561 = vld [vmem:[%s3 + $0x14c] sm:$0xf]
  %v1562 = vld [vmem:[%s3 + $0x150] sm:$0xf]
  %v1563 = vld [vmem:[%s3 + $0x154] sm:$0xf]
  %v1564 = vld [vmem:[%s3 + $0x158] sm:$0xf]
  %v1565 = vld [vmem:[%s3 + $0x15c] sm:$0xf]
  %v1566 = vld [vmem:[%s3 + $0x160] sm:$0xf]
  %v1567 = vld [vmem:[%s3 + $0x164] sm:$0xf]
  %v1568 = vld [vmem:[%s3 + $0x168] sm:$0xf]
  %v1569 = vld [vmem:[%s3 + $0x16c] sm:$0xf]
  %v1570 = vld [vmem:[%s3 + $0x170] sm:$0xf]
  %v1571 = vld [vmem:[%s3 + $0x174] sm:$0xf]
  %v1572 = vld [vmem:[%s3 + $0x178] sm:$0xf]
  %v1573 = vld [vmem:[%s3 + $0x17c] sm:$0xf]
  %v1574 = vld [vmem:[%s3 + $0x180] sm:$0xf]
  %v1575 = vld [vmem:[%s3 + $0x184] sm:$0xf]
  %v1576 = vld [vmem:[%s3 + $0x188] sm:$0xf]
  %v1577 = vld [vmem:[%s3 + $0x18c] sm:$0xf]
  %v1578 = vld [vmem:[%s3 + $0x190] sm:$0xf]
  %v1579 = vld [vmem:[%s3 + $0x194] sm:$0xf]
  %v1580 = vld [vmem:[%s3 + $0x198] sm:$0xf]
  %v1581 = vld [vmem:[%s3 + $0x19c] sm:$0xf]
  %v1582 = vld [vmem:[%s3 + $0x1a0] sm:$0xf]
  %v1583 = vld [vmem:[%s3 + $0x1a4] sm:$0xf]
  %v1584 = vld [vmem:[%s3 + $0x1a8] sm:$0xf]
  %v1585 = vld [vmem:[%s3 + $0x1ac] sm:$0xf]
  %v1586 = vld [vmem:[%s3 + $0x1b0] sm:$0xf]
  %v1587 = vld [vmem:[%s3 + $0x1b4] sm:$0xf]
  %v1588 = vld [vmem:[%s3 + $0x1b8] sm:$0xf]
  %v1589 = vld [vmem:[%s3 + $0x1bc] sm:$0xf]
  %v1590 = vld [vmem:[%s3 + $0x1c0] sm:$0xf]
  %v1591 = vld [vmem:[%s3 + $0x1c4] sm:$0xf]
  %v1592 = vld [vmem:[%s3 + $0x1c8] sm:$0xf]
  %v1593 = vld [vmem:[%s3 + $0x1cc] sm:$0xf]
  %v1594 = vld [vmem:[%s3 + $0x1d0] sm:$0xf]
  %v1595 = vld [vmem:[%s3 + $0x1d4] sm:$0xf]
  %v1596 = vld [vmem:[%s3 + $0x1d8] sm:$0xf]
  %v1597 = vld [vmem:[%s3 + $0x1dc] sm:$0xf]
  %v1598 = vld [vmem:[%s3 + $0x1e0] sm:$0xf]
  %v1599 = vld [vmem:[%s3 + $0x1e4] sm:$0xf]
  %v1600 = vld [vmem:[%s3 + $0x1e8] sm:$0xf]
  %v1601 = vld [vmem:[%s3 + $0x1ec] sm:$0xf]
  %v1602 = vld [vmem:[%s3 + $0x1f0] sm:$0xf]
  %v1603 = vld [vmem:[%s3 + $0x1f4] sm:$0xf]
  %v1604 = vld [vmem:[%s3 + $0x1f8] sm:$0xf]
  %v1605 = vld [vmem:[%s3 + $0x1fc] sm:$0xf]
  %v1734 = vunpack.c.l.b16 %v1478
  %v1735 = vunpack.c.l.b16 %v1479
  %v1736 = vunpack.c.l.b16 %v1480
  %v1737 = vunpack.c.l.b16 %v1481
  %v1738 = vunpack.c.l.b16 %v1482
  %v1739 = vunpack.c.l.b16 %v1483
  %v1740 = vunpack.c.l.b16 %v1484
  %v1741 = vunpack.c.l.b16 %v1485
  %v1742 = vunpack.c.l.b16 %v1486
  %v1743 = vunpack.c.l.b16 %v1487
  %v1744 = vunpack.c.l.b16 %v1488
  %v1745 = vunpack.c.l.b16 %v1489
  %v1746 = vunpack.c.l.b16 %v1490
  %v1747 = vunpack.c.l.b16 %v1491
  %v1748 = vunpack.c.l.b16 %v1492
  %v1749 = vunpack.c.l.b16 %v1493
  %v1750 = vunpack.c.l.b16 %v1494
  %v1751 = vunpack.c.l.b16 %v1495
  %v1752 = vunpack.c.l.b16 %v1496
  %v1753 = vunpack.c.l.b16 %v1497
  %v1754 = vunpack.c.l.b16 %v1498
  %v1755 = vunpack.c.l.b16 %v1499
  %v1756 = vunpack.c.l.b16 %v1500
  %v1757 = vunpack.c.l.b16 %v1501
  %v1758 = vunpack.c.l.b16 %v1502
  %v1759 = vunpack.c.l.b16 %v1503
  %v1760 = vunpack.c.l.b16 %v1504
  %v1761 = vunpack.c.l.b16 %v1505
  %v1762 = vunpack.c.l.b16 %v1506
  %v1763 = vunpack.c.l.b16 %v1507
  %v1764 = vunpack.c.l.b16 %v1508
  %v1765 = vunpack.c.l.b16 %v1509
  %v1766 = vunpack.c.l.b16 %v1510
  %v1767 = vunpack.c.l.b16 %v1511
  %v1768 = vunpack.c.l.b16 %v1512
  %v1769 = vunpack.c.l.b16 %v1513
  %v1770 = vunpack.c.l.b16 %v1514
  %v1771 = vunpack.c.l.b16 %v1515
  %v1772 = vunpack.c.l.b16 %v1516
  %v1773 = vunpack.c.l.b16 %v1517
  %v1774 = vunpack.c.l.b16 %v1518
  %v1775 = vunpack.c.l.b16 %v1519
  %v1776 = vunpack.c.l.b16 %v1520
  %v1777 = vunpack.c.l.b16 %v1521
  %v1778 = vunpack.c.l.b16 %v1522
  %v1779 = vunpack.c.l.b16 %v1523
  %v1780 = vunpack.c.l.b16 %v1524
  %v1781 = vunpack.c.l.b16 %v1525
  %v1782 = vunpack.c.l.b16 %v1526
  %v1783 = vunpack.c.l.b16 %v1527
  %v1784 = vunpack.c.l.b16 %v1528
  %v1785 = vunpack.c.l.b16 %v1529
  %v1786 = vunpack.c.l.b16 %v1530
  %v1787 = vunpack.c.l.b16 %v1531
  %v1788 = vunpack.c.l.b16 %v1532
  %v1789 = vunpack.c.l.b16 %v1533
  %v1790 = vunpack.c.l.b16 %v1534
  %v1791 = vunpack.c.l.b16 %v1535
  %v1792 = vunpack.c.l.b16 %v1536
  %v1793 = vunpack.c.l.b16 %v1537
  %v1794 = vunpack.c.l.b16 %v1538
  %v1795 = vunpack.c.l.b16 %v1539
  %v1796 = vunpack.c.l.b16 %v1540
  %v1797 = vunpack.c.l.b16 %v1541
  %v1798 = vunpack.c.l.b16 %v1542
  %v1799 = vunpack.c.l.b16 %v1543
  %v1800 = vunpack.c.l.b16 %v1544
  %v1801 = vunpack.c.l.b16 %v1545
  %v1802 = vunpack.c.l.b16 %v1546
  %v1803 = vunpack.c.l.b16 %v1547
  %v1804 = vunpack.c.l.b16 %v1548
  %v1805 = vunpack.c.l.b16 %v1549
  %v1806 = vunpack.c.l.b16 %v1550
  %v1807 = vunpack.c.l.b16 %v1551
  %v1808 = vunpack.c.l.b16 %v1552
  %v1809 = vunpack.c.l.b16 %v1553
  %v1810 = vunpack.c.l.b16 %v1554
  %v1811 = vunpack.c.l.b16 %v1555
  %v1812 = vunpack.c.l.b16 %v1556
  %v1813 = vunpack.c.l.b16 %v1557
  %v1814 = vunpack.c.l.b16 %v1558
  %v1815 = vunpack.c.l.b16 %v1559
  %v1816 = vunpack.c.l.b16 %v1560
  %v1817 = vunpack.c.l.b16 %v1561
  %v1818 = vunpack.c.l.b16 %v1562
  %v1819 = vunpack.c.l.b16 %v1563
  %v1820 = vunpack.c.l.b16 %v1564
  %v1821 = vunpack.c.l.b16 %v1565
  %v1822 = vunpack.c.l.b16 %v1566
  %v1823 = vunpack.c.l.b16 %v1567
  %v1824 = vunpack.c.l.b16 %v1568
  %v1825 = vunpack.c.l.b16 %v1569
  %v1826 = vunpack.c.l.b16 %v1570
  %v1827 = vunpack.c.l.b16 %v1571
  %v1828 = vunpack.c.l.b16 %v1572
  %v1829 = vunpack.c.l.b16 %v1573
  %v1830 = vunpack.c.l.b16 %v1574
  %v1831 = vunpack.c.l.b16 %v1575
  %v1832 = vunpack.c.l.b16 %v1576
  %v1833 = vunpack.c.l.b16 %v1577
  %v1834 = vunpack.c.l.b16 %v1578
  %v1835 = vunpack.c.l.b16 %v1579
  %v1836 = vunpack.c.l.b16 %v1580
  %v1837 = vunpack.c.l.b16 %v1581
  %v1838 = vunpack.c.l.b16 %v1582
  %v1839 = vunpack.c.l.b16 %v1583
  %v1840 = vunpack.c.l.b16 %v1584
  %v1841 = vunpack.c.l.b16 %v1585
  %v1842 = vunpack.c.l.b16 %v1586
  %v1843 = vunpack.c.l.b16 %v1587
  %v1844 = vunpack.c.l.b16 %v1588
  %v1845 = vunpack.c.l.b16 %v1589
  %v1846 = vunpack.c.l.b16 %v1590
  %v1847 = vunpack.c.l.b16 %v1591
  %v1848 = vunpack.c.l.b16 %v1592
  %v1849 = vunpack.c.l.b16 %v1593
  %v1850 = vunpack.c.l.b16 %v1594
  %v1851 = vunpack.c.l.b16 %v1595
  %v1852 = vunpack.c.l.b16 %v1596
  %v1853 = vunpack.c.l.b16 %v1597
  %v1854 = vunpack.c.l.b16 %v1598
  %v1855 = vunpack.c.l.b16 %v1599
  %v1856 = vunpack.c.l.b16 %v1600
  %v1857 = vunpack.c.l.b16 %v1601
  %v1858 = vunpack.c.l.b16 %v1602
  %v1859 = vunpack.c.l.b16 %v1603
  %v1860 = vunpack.c.l.b16 %v1604
  %v1861 = vunpack.c.l.b16 %v1605
  %v1862 = vpack.c.b16 %v1735, %v1734
  %v1863 = vpack.c.b16 %v1737, %v1736
  %v1864 = vpack.c.b16 %v1739, %v1738
  %v1865 = vpack.c.b16 %v1741, %v1740
  %v1866 = vpack.c.b16 %v1743, %v1742
  %v1867 = vpack.c.b16 %v1745, %v1744
  %v1868 = vpack.c.b16 %v1747, %v1746
  %v1869 = vpack.c.b16 %v1749, %v1748
  %v1870 = vpack.c.b16 %v1751, %v1750
  %v1871 = vpack.c.b16 %v1753, %v1752
  %v1872 = vpack.c.b16 %v1755, %v1754
  %v1873 = vpack.c.b16 %v1757, %v1756
  %v1874 = vpack.c.b16 %v1759, %v1758
  %v1875 = vpack.c.b16 %v1761, %v1760
  %v1876 = vpack.c.b16 %v1763, %v1762
  %v1877 = vpack.c.b16 %v1765, %v1764
  %v1878 = vpack.c.b16 %v1767, %v1766
  %v1879 = vpack.c.b16 %v1769, %v1768
  %v1880 = vpack.c.b16 %v1771, %v1770
  %v1881 = vpack.c.b16 %v1773, %v1772
  %v1882 = vpack.c.b16 %v1775, %v1774
  %v1883 = vpack.c.b16 %v1777, %v1776
  %v1884 = vpack.c.b16 %v1779, %v1778
  %v1885 = vpack.c.b16 %v1781, %v1780
  %v1886 = vpack.c.b16 %v1783, %v1782
  %v1887 = vpack.c.b16 %v1785, %v1784
  %v1888 = vpack.c.b16 %v1787, %v1786
  %v1889 = vpack.c.b16 %v1789, %v1788
  %v1890 = vpack.c.b16 %v1791, %v1790
  %v1891 = vpack.c.b16 %v1793, %v1792
  %v1892 = vpack.c.b16 %v1795, %v1794
  %v1893 = vpack.c.b16 %v1797, %v1796
  %v1894 = vpack.c.b16 %v1799, %v1798
  %v1895 = vpack.c.b16 %v1801, %v1800
  %v1896 = vpack.c.b16 %v1803, %v1802
  %v1897 = vpack.c.b16 %v1805, %v1804
  %v1898 = vpack.c.b16 %v1807, %v1806
  %v1899 = vpack.c.b16 %v1809, %v1808
  %v1900 = vpack.c.b16 %v1811, %v1810
  %v1901 = vpack.c.b16 %v1813, %v1812
  %v1902 = vpack.c.b16 %v1815, %v1814
  %v1903 = vpack.c.b16 %v1817, %v1816
  %v1904 = vpack.c.b16 %v1819, %v1818
  %v1905 = vpack.c.b16 %v1821, %v1820
  %v1906 = vpack.c.b16 %v1823, %v1822
  %v1907 = vpack.c.b16 %v1825, %v1824
  %v1908 = vpack.c.b16 %v1827, %v1826
  %v1909 = vpack.c.b16 %v1829, %v1828
  %v1910 = vpack.c.b16 %v1831, %v1830
  %v1911 = vpack.c.b16 %v1833, %v1832
  %v1912 = vpack.c.b16 %v1835, %v1834
  %v1913 = vpack.c.b16 %v1837, %v1836
  %v1914 = vpack.c.b16 %v1839, %v1838
  %v1915 = vpack.c.b16 %v1841, %v1840
  %v1916 = vpack.c.b16 %v1843, %v1842
  %v1917 = vpack.c.b16 %v1845, %v1844
  %v1918 = vpack.c.b16 %v1847, %v1846
  %v1919 = vpack.c.b16 %v1849, %v1848
  %v1920 = vpack.c.b16 %v1851, %v1850
  %v1921 = vpack.c.b16 %v1853, %v1852
  %v1922 = vpack.c.b16 %v1855, %v1854
  %v1923 = vpack.c.b16 %v1857, %v1856
  %v1924 = vpack.c.b16 %v1859, %v1858
  %v1925 = vpack.c.b16 %v1861, %v1860
  %1990 = vmatprep.subr.bf16.mxu0 0
  %1991 = vmatpush1.bf16.msra.mxu0 %v1862
  %1992 = vmatprep.subr.bf16.mxu0 0
  %1993 = vmatpush1.bf16.msra.mxu0 %v1863
  %1994 = vmatprep.subr.bf16.mxu0 0
  %1995 = vmatpush1.bf16.msra.mxu0 %v1864
  %1996 = vmatprep.subr.bf16.mxu0 0
  %1997 = vmatpush1.bf16.msra.mxu0 %v1865
  %1998 = vmatprep.subr.bf16.mxu0 0
  %1999 = vmatpush1.bf16.msra.mxu0 %v1866
  %2000 = vmatprep.subr.bf16.mxu0 0
  %2001 = vmatpush1.bf16.msra.mxu0 %v1867
  %2002 = vmatprep.subr.bf16.mxu0 0
  %2003 = vmatpush1.bf16.msra.mxu0 %v1868
  %2004 = vmatprep.subr.bf16.mxu0 0
  %2005 = vmatpush1.bf16.msra.mxu0 %v1869
  %2006 = vmatprep.subr.bf16.mxu0 0
  %2007 = vmatpush1.bf16.msra.mxu0 %v1870
  %2008 = vmatprep.subr.bf16.mxu0 0
  %2009 = vmatpush1.bf16.msra.mxu0 %v1871
  %2010 = vmatprep.subr.bf16.mxu0 0
  %2011 = vmatpush1.bf16.msra.mxu0 %v1872
  %2012 = vmatprep.subr.bf16.mxu0 0
  %2013 = vmatpush1.bf16.msra.mxu0 %v1873
  %2014 = vmatprep.subr.bf16.mxu0 0
  %2015 = vmatpush1.bf16.msra.mxu0 %v1874
  %2016 = vmatprep.subr.bf16.mxu0 0
  %2017 = vmatpush1.bf16.msra.mxu0 %v1875
  %2018 = vmatprep.subr.bf16.mxu0 0
  %2019 = vmatpush1.bf16.msra.mxu0 %v1876
  %2020 = vmatprep.subr.bf16.mxu0 0
  %2021 = vmatpush1.bf16.msra.mxu0 %v1877
  %2022 = vmatprep.mubr.bf16.mxu0 %v1471
  %2023 = vmatmul.mubr.bf16.gmra.mrb[0].mxu0 %v1470
  %v2024 = vpop.f32.mrb[0].mxu0
  %v2025 = vadd.f32 0.0, %v2024
  %v2026 = vpop.f32.mrb[0].mxu0
  %v2027 = vpop.f32.mrb[0].mxu0
  %v2028 = vadd.f32 0.0, %v2027
  %v2029 = vpop.f32.mrb[0].mxu0
  %2030 = vdwg.mxu0
  %2031 = vmatprep.subr.bf16.mxu0 0
  %2032 = vmatpush1.bf16.msra.mxu0 %v1878
  %2033 = vmatprep.subr.bf16.mxu0 0
  %2034 = vmatpush1.bf16.msra.mxu0 %v1879
  %2035 = vmatprep.subr.bf16.mxu0 0
  %2036 = vmatpush1.bf16.msra.mxu0 %v1880
  %2037 = vmatprep.subr.bf16.mxu0 0
  %2038 = vmatpush1.bf16.msra.mxu0 %v1881
  %2039 = vmatprep.subr.bf16.mxu0 0
  %2040 = vmatpush1.bf16.msra.mxu0 %v1882
  %2041 = vmatprep.subr.bf16.mxu0 0
  %2042 = vmatpush1.bf16.msra.mxu0 %v1883
  %2043 = vmatprep.subr.bf16.mxu0 0
  %2044 = vmatpush1.bf16.msra.mxu0 %v1884
  %2045 = vmatprep.subr.bf16.mxu0 0
  %2046 = vmatpush1.bf16.msra.mxu0 %v1885
  %2047 = vmatprep.subr.bf16.mxu0 0
  %2048 = vmatpush1.bf16.msra.mxu0 %v1886
  %2049 = vmatprep.subr.bf16.mxu0 0
  %2050 = vmatpush1.bf16.msra.mxu0 %v1887
  %2051 = vmatprep.subr.bf16.mxu0 0
  %2052 = vmatpush1.bf16.msra.mxu0 %v1888
  %2053 = vmatprep.subr.bf16.mxu0 0
  %2054 = vmatpush1.bf16.msra.mxu0 %v1889
  %2055 = vmatprep.subr.bf16.mxu0 0
  %2056 = vmatpush1.bf16.msra.mxu0 %v1890
  %2057 = vmatprep.subr.bf16.mxu0 0
  %2058 = vmatpush1.bf16.msra.mxu0 %v1891
  %2059 = vmatprep.subr.bf16.mxu0 0
  %2060 = vmatpush1.bf16.msra.mxu0 %v1892
  %2061 = vmatprep.subr.bf16.mxu0 0
  %2062 = vmatpush1.bf16.msra.mxu0 %v1893
  %2063 = vmatprep.mubr.bf16.mxu0 %v1473
  %2064 = vmatmul.mubr.bf16.gmra.mrb[0].mxu0 %v1472
  %v2065 = vpop.f32.mrb[0].mxu0
  %v2066 = vadd.f32 %v2025, %v2065
  %v2067 = vpop.f32.mrb[0].mxu0
  %v2068 = vpop.f32.mrb[0].mxu0
  %v2069 = vadd.f32 %v2028, %v2068
  %v2070 = vpop.f32.mrb[0].mxu0
  %2071 = vdwg.mxu0
  %2072 = vmatprep.subr.bf16.mxu0 0
  %2073 = vmatpush1.bf16.msra.mxu0 %v1894
  %2074 = vmatprep.subr.bf16.mxu0 0
  %2075 = vmatpush1.bf16.msra.mxu0 %v1895
  %2076 = vmatprep.subr.bf16.mxu0 0
  %2077 = vmatpush1.bf16.msra.mxu0 %v1896
  %2078 = vmatprep.subr.bf16.mxu0 0
  %2079 = vmatpush1.bf16.msra.mxu0 %v1897
  %2080 = vmatprep.subr.bf16.mxu0 0
  %2081 = vmatpush1.bf16.msra.mxu0 %v1898
  %2082 = vmatprep.subr.bf16.mxu0 0
  %2083 = vmatpush1.bf16.msra.mxu0 %v1899
  %2084 = vmatprep.subr.bf16.mxu0 0
  %2085 = vmatpush1.bf16.msra.mxu0 %v1900
  %2086 = vmatprep.subr.bf16.mxu0 0
  %2087 = vmatpush1.bf16.msra.mxu0 %v1901
  %2088 = vmatprep.subr.bf16.mxu0 0
  %2089 = vmatpush1.bf16.msra.mxu0 %v1902
  %2090 = vmatprep.subr.bf16.mxu0 0
  %2091 = vmatpush1.bf16.msra.mxu0 %v1903
  %2092 = vmatprep.subr.bf16.mxu0 0
  %2093 = vmatpush1.bf16.msra.mxu0 %v1904
  %2094 = vmatprep.subr.bf16.mxu0 0
  %2095 = vmatpush1.bf16.msra.mxu0 %v1905
  %2096 = vmatprep.subr.bf16.mxu0 0
  %2097 = vmatpush1.bf16.msra.mxu0 %v1906
  %2098 = vmatprep.subr.bf16.mxu0 0
  %2099 = vmatpush1.bf16.msra.mxu0 %v1907
  %2100 = vmatprep.subr.bf16.mxu0 0
  %2101 = vmatpush1.bf16.msra.mxu0 %v1908
  %2102 = vmatprep.subr.bf16.mxu0 0
  %2103 = vmatpush1.bf16.msra.mxu0 %v1909
  %2104 = vmatprep.mubr.bf16.mxu0 %v1475
  %2105 = vmatmul.mubr.bf16.gmra.mrb[0].mxu0 %v1474
  %v2106 = vpop.f32.mrb[0].mxu0
  %v2107 = vadd.f32 %v2066, %v2106
  %v2108 = vpop.f32.mrb[0].mxu0
  %v2109 = vpop.f32.mrb[0].mxu0
  %v2110 = vadd.f32 %v2069, %v2109
  %v2111 = vpop.f32.mrb[0].mxu0
  %2112 = vdwg.mxu0
  %2113 = vmatprep.subr.bf16.mxu0 0
  %2114 = vmatpush1.bf16.msra.mxu0 %v1910
  %2115 = vmatprep.subr.bf16.mxu0 0
  %2116 = vmatpush1.bf16.msra.mxu0 %v1911
  %2117 = vmatprep.subr.bf16.mxu0 0
  %2118 = vmatpush1.bf16.msra.mxu0 %v1912
  %2119 = vmatprep.subr.bf16.mxu0 0
  %2120 = vmatpush1.bf16.msra.mxu0 %v1913
  %2121 = vmatprep.subr.bf16.mxu0 0
  %2122 = vmatpush1.bf16.msra.mxu0 %v1914
  %2123 = vmatprep.subr.bf16.mxu0 0
  %2124 = vmatpush1.bf16.msra.mxu0 %v1915
  %2125 = vmatprep.subr.bf16.mxu0 0
  %2126 = vmatpush1.bf16.msra.mxu0 %v1916
  %2127 = vmatprep.subr.bf16.mxu0 0
  %2128 = vmatpush1.bf16.msra.mxu0 %v1917
  %2129 = vmatprep.subr.bf16.mxu0 0
  %2130 = vmatpush1.bf16.msra.mxu0 %v1918
  %2131 = vmatprep.subr.bf16.mxu0 0
  %2132 = vmatpush1.bf16.msra.mxu0 %v1919
  %2133 = vmatprep.subr.bf16.mxu0 0
  %2134 = vmatpush1.bf16.msra.mxu0 %v1920
  %2135 = vmatprep.subr.bf16.mxu0 0
  %2136 = vmatpush1.bf16.msra.mxu0 %v1921
  %2137 = vmatprep.subr.bf16.mxu0 0
  %2138 = vmatpush1.bf16.msra.mxu0 %v1922
  %2139 = vmatprep.subr.bf16.mxu0 0
  %2140 = vmatpush1.bf16.msra.mxu0 %v1923
  %2141 = vmatprep.subr.bf16.mxu0 0
  %2142 = vmatpush1.bf16.msra.mxu0 %v1924
  %2143 = vmatprep.subr.bf16.mxu0 0
  %2144 = vmatpush1.bf16.msra.mxu0 %v1925
  %2145 = vmatprep.mubr.bf16.mxu0 %v1477
  %2146 = vmatmul.mubr.bf16.gmra.mrb[0].mxu0 %v1476
  %v2147 = vpop.f32.mrb[0].mxu0
  %v2148 = vadd.f32 %v2107, %v2147
  %v2149 = vpop.f32.mrb[0].mxu0
  %v2150 = vpop.f32.mrb[0].mxu0
  %v2151 = vadd.f32 %v2110, %v2150
  %v2152 = vpop.f32.mrb[0].mxu0
  %2153 = vdwg.mxu0
  %v2154 = vadd.f32 %v1452, %v2148
  %v2155 = vadd.f32 %v1453, %v2151
  %2156 = vst [vmem:[#allocation4] sm:$0xff] %v2154
  %2157 = vst [vmem:[#allocation4 + $0x8] sm:$0xff] %v2155
  // Predicated region
  $region34: #{_fwd.1} parent=0 // pred_check
    %p2158 = pneg %p30
  $region35: #{_fwd.1} parent=0 // pred_check_branch
    %2160 = sbr.rel (%p2158) target = $region37
  $region36: #{_fwd.1} parent=0 // pred_region
    %v2161 = vld [vmem:[#allocation2] sm:$0xff]
    %v2162 = vld [vmem:[#allocation2 + $0x8] sm:$0xff]
    %v2163 = vld [vmem:[%s4] sm:$0x1]
    %v2165 = vlaneseq
    %v2166 = vshrl.u32 %v2165, 7
    %v2167 = vsub.s32 0, %v2166
    %v2168 = vrot.slane %v2163, %v2167
    %v2170 = vadd.f32 %v2161, %v2168
    %v2171 = vadd.f32 %v2162, %v2168
    %v2172 = vmax.f32 %v2170, 0.0
    %v2173 = vmax.f32 %v2171, 0.0
    %v2174 = vpack.c.bf16 %v2173, %v2172
    %v2175 = vld [vmem:[%s5] sm:$0xf]
    %v2176 = vld [vmem:[%s5 + $0x4] sm:$0xf]
    %v2177 = vld [vmem:[%s5 + $0x8] sm:$0xf]
    %v2178 = vld [vmem:[%s5 + $0xc] sm:$0xf]
    %v2179 = vld [vmem:[%s5 + $0x10] sm:$0xf]
    %v2180 = vld [vmem:[%s5 + $0x14] sm:$0xf]
    %v2181 = vld [vmem:[%s5 + $0x18] sm:$0xf]
    %v2182 = vld [vmem:[%s5 + $0x1c] sm:$0xf]
    %v2183 = vld [vmem:[%s5 + $0x20] sm:$0xf]
    %v2184 = vld [vmem:[%s5 + $0x24] sm:$0xf]
    %v2185 = vld [vmem:[%s5 + $0x28] sm:$0xf]
    %v2186 = vld [vmem:[%s5 + $0x2c] sm:$0xf]
    %v2187 = vld [vmem:[%s5 + $0x30] sm:$0xf]
    %v2188 = vld [vmem:[%s5 + $0x34] sm:$0xf]
    %v2189 = vld [vmem:[%s5 + $0x38] sm:$0xf]
    %v2190 = vld [vmem:[%s5 + $0x3c] sm:$0xf]
    %v2191 = vld [vmem:[%s6] sm:$0x1]
    %v2193 = vlaneseq
    %v2194 = vshrl.u32 %v2193, 7
    %v2195 = vsub.s32 0, %v2194
    %v2196 = vrot.slane %v2191, %v2195
    %v2214 = vunpack.c.l.b16 %v2175
    %v2215 = vunpack.c.l.b16 %v2176
    %v2216 = vunpack.c.l.b16 %v2177
    %v2217 = vunpack.c.l.b16 %v2178
    %v2218 = vunpack.c.l.b16 %v2179
    %v2219 = vunpack.c.l.b16 %v2180
    %v2220 = vunpack.c.l.b16 %v2181
    %v2221 = vunpack.c.l.b16 %v2182
    %v2222 = vunpack.c.l.b16 %v2183
    %v2223 = vunpack.c.l.b16 %v2184
    %v2224 = vunpack.c.l.b16 %v2185
    %v2225 = vunpack.c.l.b16 %v2186
    %v2226 = vunpack.c.l.b16 %v2187
    %v2227 = vunpack.c.l.b16 %v2188
    %v2228 = vunpack.c.l.b16 %v2189
    %v2229 = vunpack.c.l.b16 %v2190
    %v2230 = vpack.c.b16 %v2215, %v2214
    %v2231 = vpack.c.b16 %v2217, %v2216
    %v2232 = vpack.c.b16 %v2219, %v2218
    %v2233 = vpack.c.b16 %v2221, %v2220
    %v2234 = vpack.c.b16 %v2223, %v2222
    %v2235 = vpack.c.b16 %v2225, %v2224
    %v2236 = vpack.c.b16 %v2227, %v2226
    %v2237 = vpack.c.b16 %v2229, %v2228
    %2246 = vmatprep.subr.bf16.mxu0 0
    %2247 = vmatpush1.bf16.msra.mxu0 %v2230
    %2248 = vmatprep.subr.bf16.mxu0 0
    %2249 = vmatpush1.bf16.msra.mxu0 %v2231
    %2250 = vmatprep.subr.bf16.mxu0 0
    %2251 = vmatpush1.bf16.msra.mxu0 %v2232
    %2252 = vmatprep.subr.bf16.mxu0 0
    %2253 = vmatpush1.bf16.msra.mxu0 %v2233
    %2254 = vmatprep.subr.bf16.mxu0 0
    %2255 = vmatpush1.bf16.msra.mxu0 %v2234
    %2256 = vmatprep.subr.bf16.mxu0 0
    %2257 = vmatpush1.bf16.msra.mxu0 %v2235
    %2258 = vmatprep.subr.bf16.mxu0 0
    %2259 = vmatpush1.bf16.msra.mxu0 %v2236
    %2260 = vmatprep.subr.bf16.mxu0 0
    %2261 = vmatpush1.bf16.msra.mxu0 %v2237
    %2262 = vmatprep.subr.bf16.mxu0 0
    %2263 = vmatpush1.bf16.msra.mxu0 0
    %2264 = vmatprep.subr.bf16.mxu0 0
    %2265 = vmatpush1.bf16.msra.mxu0 0
    %2266 = vmatprep.subr.bf16.mxu0 0
    %2267 = vmatpush1.bf16.msra.mxu0 0
    %2268 = vmatprep.subr.bf16.mxu0 0
    %2269 = vmatpush1.bf16.msra.mxu0 0
    %2270 = vmatprep.subr.bf16.mxu0 0
    %2271 = vmatpush1.bf16.msra.mxu0 0
    %2272 = vmatprep.subr.bf16.mxu0 0
    %2273 = vmatpush1.bf16.msra.mxu0 0
    %2274 = vmatprep.subr.bf16.mxu0 0
    %2275 = vmatpush1.bf16.msra.mxu0 0
    %2276 = vmatprep.subr.bf16.mxu0 0
    %2277 = vmatpush1.bf16.msra.mxu0 0
    %2278 = vmatprep.mubr.bf16.mxu0 0
    %2279 = vmatmul.mubr.bf16.gmra.mrb[0].mxu0 %v2174
    %v2280 = vpop.f32.mrb[0].mxu0
    %v2281 = vadd.f32 %v2196, %v2280
    %v2282 = vpop.f32.mrb[0].mxu0
    %v2283 = vpop.f32.mrb[0].mxu0
    %v2284 = vadd.f32 %v2196, %v2283
    %v2285 = vpop.f32.mrb[0].mxu0
    %2286 = vdwg.mxu0
    %2287 = vst [vmem:[%s7] sm:$0xff] %v2281
    %2288 = vst [vmem:[%s7 + $0x8] sm:$0xff] %v2284
    %v2289 = vld [vmem:[#allocation3] sm:$0xff]
    %v2290 = vld [vmem:[#allocation3 + $0x8] sm:$0xff]
    %v2291 = vld [vmem:[%s4] sm:$0x1]
    %v2293 = vlaneseq
    %v2294 = vshrl.u32 %v2293, 7
    %v2295 = vsub.s32 0, %v2294
    %v2296 = vrot.slane %v2291, %v2295
    %v2298 = vadd.f32 %v2289, %v2296
    %v2299 = vadd.f32 %v2290, %v2296
    %v2300 = vmax.f32 %v2298, 0.0
    %v2301 = vmax.f32 %v2299, 0.0
    %v2302 = vpack.c.bf16 %v2301, %v2300
    %v2303 = vld [vmem:[%s5] sm:$0xf]
    %v2304 = vld [vmem:[%s5 + $0x4] sm:$0xf]
    %v2305 = vld [vmem:[%s5 + $0x8] sm:$0xf]
    %v2306 = vld [vmem:[%s5 + $0xc] sm:$0xf]
    %v2307 = vld [vmem:[%s5 + $0x10] sm:$0xf]
    %v2308 = vld [vmem:[%s5 + $0x14] sm:$0xf]
    %v2309 = vld [vmem:[%s5 + $0x18] sm:$0xf]
    %v2310 = vld [vmem:[%s5 + $0x1c] sm:$0xf]
    %v2311 = vld [vmem:[%s5 + $0x20] sm:$0xf]
    %v2312 = vld [vmem:[%s5 + $0x24] sm:$0xf]
    %v2313 = vld [vmem:[%s5 + $0x28] sm:$0xf]
    %v2314 = vld [vmem:[%s5 + $0x2c] sm:$0xf]
    %v2315 = vld [vmem:[%s5 + $0x30] sm:$0xf]
    %v2316 = vld [vmem:[%s5 + $0x34] sm:$0xf]
    %v2317 = vld [vmem:[%s5 + $0x38] sm:$0xf]
    %v2318 = vld [vmem:[%s5 + $0x3c] sm:$0xf]
    %v2319 = vld [vmem:[%s6] sm:$0x1]
    %v2321 = vlaneseq
    %v2322 = vshrl.u32 %v2321, 7
    %v2323 = vsub.s32 0, %v2322
    %v2324 = vrot.slane %v2319, %v2323
    %v2342 = vunpack.c.l.b16 %v2303
    %v2343 = vunpack.c.l.b16 %v2304
    %v2344 = vunpack.c.l.b16 %v2305
    %v2345 = vunpack.c.l.b16 %v2306
    %v2346 = vunpack.c.l.b16 %v2307
    %v2347 = vunpack.c.l.b16 %v2308
    %v2348 = vunpack.c.l.b16 %v2309
    %v2349 = vunpack.c.l.b16 %v2310
    %v2350 = vunpack.c.l.b16 %v2311
    %v2351 = vunpack.c.l.b16 %v2312
    %v2352 = vunpack.c.l.b16 %v2313
    %v2353 = vunpack.c.l.b16 %v2314
    %v2354 = vunpack.c.l.b16 %v2315
    %v2355 = vunpack.c.l.b16 %v2316
    %v2356 = vunpack.c.l.b16 %v2317
    %v2357 = vunpack.c.l.b16 %v2318
    %v2358 = vpack.c.b16 %v2343, %v2342
    %v2359 = vpack.c.b16 %v2345, %v2344
    %v2360 = vpack.c.b16 %v2347, %v2346
    %v2361 = vpack.c.b16 %v2349, %v2348
    %v2362 = vpack.c.b16 %v2351, %v2350
    %v2363 = vpack.c.b16 %v2353, %v2352
    %v2364 = vpack.c.b16 %v2355, %v2354
    %v2365 = vpack.c.b16 %v2357, %v2356
    %2374 = vmatprep.subr.bf16.mxu0 0
    %2375 = vmatpush1.bf16.msra.mxu0 %v2358
    %2376 = vmatprep.subr.bf16.mxu0 0
    %2377 = vmatpush1.bf16.msra.mxu0 %v2359
    %2378 = vmatprep.subr.bf16.mxu0 0
    %2379 = vmatpush1.bf16.msra.mxu0 %v2360
    %2380 = vmatprep.subr.bf16.mxu0 0
    %2381 = vmatpush1.bf16.msra.mxu0 %v2361
    %2382 = vmatprep.subr.bf16.mxu0 0
    %2383 = vmatpush1.bf16.msra.mxu0 %v2362
    %2384 = vmatprep.subr.bf16.mxu0 0
    %2385 = vmatpush1.bf16.msra.mxu0 %v2363
    %2386 = vmatprep.subr.bf16.mxu0 0
    %2387 = vmatpush1.bf16.msra.mxu0 %v2364
    %2388 = vmatprep.subr.bf16.mxu0 0
    %2389 = vmatpush1.bf16.msra.mxu0 %v2365
    %2390 = vmatprep.subr.bf16.mxu0 0
    %2391 = vmatpush1.bf16.msra.mxu0 0
    %2392 = vmatprep.subr.bf16.mxu0 0
    %2393 = vmatpush1.bf16.msra.mxu0 0
    %2394 = vmatprep.subr.bf16.mxu0 0
    %2395 = vmatpush1.bf16.msra.mxu0 0
    %2396 = vmatprep.subr.bf16.mxu0 0
    %2397 = vmatpush1.bf16.msra.mxu0 0
    %2398 = vmatprep.subr.bf16.mxu0 0
    %2399 = vmatpush1.bf16.msra.mxu0 0
    %2400 = vmatprep.subr.bf16.mxu0 0
    %2401 = vmatpush1.bf16.msra.mxu0 0
    %2402 = vmatprep.subr.bf16.mxu0 0
    %2403 = vmatpush1.bf16.msra.mxu0 0
    %2404 = vmatprep.subr.bf16.mxu0 0
    %2405 = vmatpush1.bf16.msra.mxu0 0
    %2406 = vmatprep.mubr.bf16.mxu0 0
    %2407 = vmatmul.mubr.bf16.gmra.mrb[0].mxu0 %v2302
    %v2408 = vpop.f32.mrb[0].mxu0
    %v2409 = vadd.f32 %v2324, %v2408
    %v2410 = vpop.f32.mrb[0].mxu0
    %v2411 = vpop.f32.mrb[0].mxu0
    %v2412 = vadd.f32 %v2324, %v2411
    %v2413 = vpop.f32.mrb[0].mxu0
    %2414 = vdwg.mxu0
    %2415 = vst [vmem:[%s8] sm:$0xff] %v2409
    %2416 = vst [vmem:[%s8 + $0x8] sm:$0xff] %v2412
    %v2417 = vld [vmem:[#allocation4] sm:$0xff]
    %v2418 = vld [vmem:[#allocation4 + $0x8] sm:$0xff]
    %v2419 = vld [vmem:[%s4] sm:$0x1]
    %v2421 = vlaneseq
    %v2422 = vshrl.u32 %v2421, 7
    %v2423 = vsub.s32 0, %v2422
    %v2424 = vrot.slane %v2419, %v2423
    %v2426 = vadd.f32 %v2417, %v2424
    %v2427 = vadd.f32 %v2418, %v2424
    %v2428 = vmax.f32 %v2426, 0.0
    %v2429 = vmax.f32 %v2427, 0.0
    %v2430 = vpack.c.bf16 %v2429, %v2428
    %v2431 = vld [vmem:[%s5] sm:$0xf]
    %v2432 = vld [vmem:[%s5 + $0x4] sm:$0xf]
    %v2433 = vld [vmem:[%s5 + $0x8] sm:$0xf]
    %v2434 = vld [vmem:[%s5 + $0xc] sm:$0xf]
    %v2435 = vld [vmem:[%s5 + $0x10] sm:$0xf]
    %v2436 = vld [vmem:[%s5 + $0x14] sm:$0xf]
    %v2437 = vld [vmem:[%s5 + $0x18] sm:$0xf]
    %v2438 = vld [vmem:[%s5 + $0x1c] sm:$0xf]
    %v2439 = vld [vmem:[%s5 + $0x20] sm:$0xf]
    %v2440 = vld [vmem:[%s5 + $0x24] sm:$0xf]
    %v2441 = vld [vmem:[%s5 + $0x28] sm:$0xf]
    %v2442 = vld [vmem:[%s5 + $0x2c] sm:$0xf]
    %v2443 = vld [vmem:[%s5 + $0x30] sm:$0xf]
    %v2444 = vld [vmem:[%s5 + $0x34] sm:$0xf]
    %v2445 = vld [vmem:[%s5 + $0x38] sm:$0xf]
    %v2446 = vld [vmem:[%s5 + $0x3c] sm:$0xf]
    %v2447 = vld [vmem:[%s6] sm:$0x1]
    %v2449 = vlaneseq
    %v2450 = vshrl.u32 %v2449, 7
    %v2451 = vsub.s32 0, %v2450
    %v2452 = vrot.slane %v2447, %v2451
    %v2470 = vunpack.c.l.b16 %v2431
    %v2471 = vunpack.c.l.b16 %v2432
    %v2472 = vunpack.c.l.b16 %v2433
    %v2473 = vunpack.c.l.b16 %v2434
    %v2474 = vunpack.c.l.b16 %v2435
    %v2475 = vunpack.c.l.b16 %v2436
    %v2476 = vunpack.c.l.b16 %v2437
    %v2477 = vunpack.c.l.b16 %v2438
    %v2478 = vunpack.c.l.b16 %v2439
    %v2479 = vunpack.c.l.b16 %v2440
    %v2480 = vunpack.c.l.b16 %v2441
    %v2481 = vunpack.c.l.b16 %v2442
    %v2482 = vunpack.c.l.b16 %v2443
    %v2483 = vunpack.c.l.b16 %v2444
    %v2484 = vunpack.c.l.b16 %v2445
    %v2485 = vunpack.c.l.b16 %v2446
    %v2486 = vpack.c.b16 %v2471, %v2470
    %v2487 = vpack.c.b16 %v2473, %v2472
    %v2488 = vpack.c.b16 %v2475, %v2474
    %v2489 = vpack.c.b16 %v2477, %v2476
    %v2490 = vpack.c.b16 %v2479, %v2478
    %v2491 = vpack.c.b16 %v2481, %v2480
    %v2492 = vpack.c.b16 %v2483, %v2482
    %v2493 = vpack.c.b16 %v2485, %v2484
    %2502 = vmatprep.subr.bf16.mxu0 0
    %2503 = vmatpush1.bf16.msra.mxu0 %v2486
    %2504 = vmatprep.subr.bf16.mxu0 0
    %2505 = vmatpush1.bf16.msra.mxu0 %v2487
    %2506 = vmatprep.subr.bf16.mxu0 0
    %2507 = vmatpush1.bf16.msra.mxu0 %v2488
    %2508 = vmatprep.subr.bf16.mxu0 0
    %2509 = vmatpush1.bf16.msra.mxu0 %v2489
    %2510 = vmatprep.subr.bf16.mxu0 0
    %2511 = vmatpush1.bf16.msra.mxu0 %v2490
    %2512 = vmatprep.subr.bf16.mxu0 0
    %2513 = vmatpush1.bf16.msra.mxu0 %v2491
    %2514 = vmatprep.subr.bf16.mxu0 0
    %2515 = vmatpush1.bf16.msra.mxu0 %v2492
    %2516 = vmatprep.subr.bf16.mxu0 0
    %2517 = vmatpush1.bf16.msra.mxu0 %v2493
    %2518 = vmatprep.subr.bf16.mxu0 0
    %2519 = vmatpush1.bf16.msra.mxu0 0
    %2520 = vmatprep.subr.bf16.mxu0 0
    %2521 = vmatpush1.bf16.msra.mxu0 0
    %2522 = vmatprep.subr.bf16.mxu0 0
    %2523 = vmatpush1.bf16.msra.mxu0 0
    %2524 = vmatprep.subr.bf16.mxu0 0
    %2525 = vmatpush1.bf16.msra.mxu0 0
    %2526 = vmatprep.subr.bf16.mxu0 0
    %2527 = vmatpush1.bf16.msra.mxu0 0
    %2528 = vmatprep.subr.bf16.mxu0 0
    %2529 = vmatpush1.bf16.msra.mxu0 0
    %2530 = vmatprep.subr.bf16.mxu0 0
    %2531 = vmatpush1.bf16.msra.mxu0 0
    %2532 = vmatprep.subr.bf16.mxu0 0
    %2533 = vmatpush1.bf16.msra.mxu0 0
    %2534 = vmatprep.mubr.bf16.mxu0 0
    %2535 = vmatmul.mubr.bf16.gmra.mrb[0].mxu0 %v2430
    %v2536 = vpop.f32.mrb[0].mxu0
    %v2537 = vadd.f32 %v2452, %v2536
    %v2538 = vpop.f32.mrb[0].mxu0
    %v2539 = vpop.f32.mrb[0].mxu0
    %v2540 = vadd.f32 %v2452, %v2539
    %v2541 = vpop.f32.mrb[0].mxu0
    %2542 = vdwg.mxu0
    %2543 = vst [vmem:[%s9] sm:$0xff] %v2537
    %2544 = vst [vmem:[%s9 + $0x8] sm:$0xff] %v2540
  $region37: #{_fwd.1} parent=0 // pred_fallthru
    _
  // Predicated region
  $region38: #{_fwd.1} parent=0 // pred_check
    _
  $region39: #{_fwd.1} parent=0 // pred_check_branch
    %2546 = sbr.rel (0) target = $region41
  $region40: #{_fwd.1} parent=0 // pred_region
    _
  $region41: #{_fwd.1} parent=0 // pred_fallthru
    _
  // Predicated region
  $region42: #{_fwd.1} parent=0 // pred_check
    _
  $region43: #{_fwd.1} parent=0 // pred_check_branch
    %2548 = sbr.rel (0) target = $region45
  $region44: #{_fwd.1} parent=0 // pred_region
    _
  $region45: #{_fwd.1} parent=0 // pred_fallthru
    _
  // Predicated region
  $region46: #{_fwd.1} parent=0 // pred_check
    _
  $region47: #{_fwd.1} parent=0 // pred_check_branch
    %2550 = sbr.rel (0) target = $region49
  $region48: #{_fwd.1} parent=0 // pred_region
    _
  $region49: #{_fwd.1} parent=0 // pred_fallthru
    _
  // Predicated region
  $region50: #{_fwd.1} parent=0 // pred_check
    _
  $region51: #{_fwd.1} parent=0 // pred_check_branch
    %2552 = sbr.rel (0) target = $region53
  $region52: #{_fwd.1} parent=0 // pred_region
    _
  $region53: #{_fwd.1} parent=0 // pred_fallthru
    _
  // Predicated region
  $region54: #{_fwd.1} parent=0 // pred_check
    _
  $region55: #{_fwd.1} parent=0 // pred_check_branch
    %2554 = sbr.rel (0) target = $region57
  $region56: #{_fwd.1} parent=0 // pred_region
    _
  $region57: #{_fwd.1} parent=0 // pred_fallthru
    _
  // Predicated region
  $region58: #{_fwd.1} parent=0 // pred_check
    _
  $region59: #{_fwd.1} parent=0 // pred_check_branch
    %2556 = sbr.rel (0) target = $region61
  $region60: #{_fwd.1} parent=0 // pred_region
    _
  $region61: #{_fwd.1} parent=0 // pred_fallthru
    _

</llo_original>
